<compile_context>
chip_gen: v5e
topology: v5e:2x2
jax: 0.10.0
libtpu: 0.0.40
codegen_flags: <defaults>
</compile_context>

<pallas_src>
import functools

import jax
import jax.numpy as jnp
from jax import lax
from jax.experimental import pallas as pl
from jax.experimental.pallas import tpu as pltpu

BN_EPS = 1e-5
LANE = 128
VMEM_LIMIT_BYTES = 48 * 1024 * 1024   # below physical VMEM on v5e/v6e/v7x


def _round_up(x, m):
    return ((x + m - 1) // m) * m


# --------------------------------------------------------------------------
# Pallas kernels
# --------------------------------------------------------------------------
def conv_bias_relu_kernel(p_ref, w_ref, b_ref, o_ref):
    """One row tile of  relu(patches @ W_folded + b_folded)."""
    acc = jnp.dot(p_ref[...], w_ref[...], preferred_element_type=jnp.float32)
    o_ref[...] = jnp.maximum(acc + b_ref[...], 0.0).astype(o_ref.dtype)


def conv_bias_relu_pool_kernel(p_ref, w_ref, b_ref, o_ref, pool_ref):
    """Same as above, plus fused MaxPool2d((1,2)).

    Width-adjacent output pixels are consecutive rows of the flattened row
    tile (W is even and each tile starts at an even row), so the pooled tile
    is the elementwise max of even rows and odd rows of the tile just stored
    to o_ref (strided VMEM loads).
    """
    acc = jnp.dot(p_ref[...], w_ref[...], preferred_element_type=jnp.float32)
    y = jnp.maximum(acc + b_ref[...], 0.0)
    o_ref[...] = y.astype(o_ref.dtype)
    half = o_ref.shape[0] // 2
    even = o_ref[pl.ds(0, half, 2), :]   # rows 0, 2, 4, ...
    odd = o_ref[pl.ds(1, half, 2), :]    # rows 1, 3, 5, ...
    pool_ref[...] = jnp.maximum(even, odd)


# --------------------------------------------------------------------------
# pallas_call wrapper
# --------------------------------------------------------------------------
def fused_conv(patches, w_mat, bias, *, out_dtype, with_pool, tile_m=512):
    """relu(patches @ w_mat + bias); optionally also max over row pairs.

    patches: (M, K) bf16, w_mat: (K, C) bf16, bias: (C,) f32.
    C must be a multiple of 128 (lane-dense stores).  Rows are zero-padded to
    a multiple of the row tile; callers slice the padding off.
    """
    M, K = patches.shape
    C = w_mat.shape[1]
    assert C % LANE == 0, "output channels must be padded to a lane multiple"

    # Even, sublane-aligned row tile (multiple of 16 so the pooled tile is a
    # multiple of 8).  Keep >= 2 grid steps when possible so the "parallel"
    # grid axis can feed both cores on multi-TC parts.
    tile_m = min(tile_m, _round_up(pl.cdiv(M, 2), 16))
    tile_m = max(16, (tile_m // 16) * 16)
    m_pad = _round_up(M, tile_m)
    if m_pad != M:
        patches = jnp.pad(patches, ((0, m_pad - M), (0, 0)))
    grid = (m_pad // tile_m,)

    in_specs = [
        pl.BlockSpec((tile_m, K), lambda i: (i, 0)),   # patch row tile
        pl.BlockSpec((K, C), lambda i: (0, 0)),        # folded weights (resident)
        pl.BlockSpec((1, C), lambda i: (0, 0)),        # folded bias
    ]
    if with_pool:
        kernel = conv_bias_relu_pool_kernel
        out_shape = (jax.ShapeDtypeStruct((m_pad, C), out_dtype),
                     jax.ShapeDtypeStruct((m_pad // 2, C), out_dtype))
        out_specs = (pl.BlockSpec((tile_m, C), lambda i: (i, 0)),
                     pl.BlockSpec((tile_m // 2, C), lambda i: (i, 0)))
    else:
        kernel = conv_bias_relu_kernel
        out_shape = jax.ShapeDtypeStruct((m_pad, C), out_dtype)
        out_specs = pl.BlockSpec((tile_m, C), lambda i: (i, 0))

    return pl.pallas_call(
        kernel,
        out_shape=out_shape,
        grid=grid,
        in_specs=in_specs,
        out_specs=out_specs,
        compiler_params=pltpu.CompilerParams(
            dimension_semantics=("parallel",),
            vmem_limit_bytes=VMEM_LIMIT_BYTES),
    )(patches, w_mat, bias.reshape(1, C))


# --------------------------------------------------------------------------
# Glue (plain JAX): im2col, BN folding, layout transposes
# --------------------------------------------------------------------------
def im2col(x_nhwc, kh, kw):
    """(N,H,W,C) -> (N*H*W, kh*kw*C) with 'same' padding, dh-major/dw/c-minor."""
    N, H, W, C = x_nhwc.shape
    ph, pw = kh // 2, kw // 2
    xp = jnp.pad(x_nhwc, ((0, 0), (ph, ph), (pw, pw), (0, 0)))
    cols = [xp[:, dh:dh + H, dw:dw + W, :]
            for dh in range(kh) for dw in range(kw)]
    return jnp.concatenate(cols, axis=-1).reshape(N * H * W, kh * kw * C)


def fold_conv_bn(w_oihw, bias, gamma, beta, mean, var, *, c_in_pad, c_out_pad):
    """Fold eval-mode BatchNorm + conv bias into a bf16 (kh*kw*c_in_pad,
    c_out_pad) weight matrix (im2col ordering) and an f32 (c_out_pad,) bias."""
    O, I, kh, kw = w_oihw.shape
    scale = gamma * lax.rsqrt(var + BN_EPS)                         # (O,)
    w = jnp.pad(w_oihw, ((0, 0), (0, c_in_pad - I), (0, 0), (0, 0)))
    w_mat = jnp.transpose(w, (2, 3, 1, 0)).reshape(kh * kw * c_in_pad, O)
    w_mat = w_mat * scale[None, :]
    b = beta + (bias - mean) * scale
    w_mat = jnp.pad(w_mat, ((0, 0), (0, c_out_pad - O)))
    b = jnp.pad(b, (0, c_out_pad - O))
    return w_mat.astype(jnp.bfloat16), b.astype(jnp.float32)


@functools.partial(jax.jit, static_argnames=("kernel_size",))
def encoder_block_forward(x_nchw, params, kernel_size=(3, 3)):
    """Pallas implementation of EncoderBlock.forward.  Returns (x, p), NCHW."""
    kh, kw = kernel_size
    N, in_c, H, W = x_nchw.shape
    out_c = params["w1"].shape[0]
    c_pad = _round_up(out_c, LANE)
    M = N * H * W

    w1, b1 = fold_conv_bn(params["w1"], params["b1"], params["g1"],
                          params["beta1"], params["rm1"], params["rv1"],
                          c_in_pad=in_c, c_out_pad=c_pad)
    w2, b2 = fold_conv_bn(params["w2"], params["b2"], params["g2"],
                          params["beta2"], params["rm2"], params["rv2"],
                          c_in_pad=c_pad, c_out_pad=c_pad)

    x_nhwc = jnp.transpose(x_nchw, (0, 2, 3, 1)).astype(jnp.bfloat16)

    # conv1 + BN + ReLU  (bf16 intermediate, lane-padded channels)
    p1 = im2col(x_nhwc, kh, kw)
    y1 = fused_conv(p1, w1, b1, out_dtype=jnp.bfloat16, with_pool=False)
    y1 = y1[:M].reshape(N, H, W, c_pad)

    # conv2 + BN + ReLU (+ fused MaxPool2d((1,2)) when W is even)
    p2 = im2col(y1, kh, kw)
    if W % 2 == 0:
        y2_full, pooled_full = fused_conv(p2, w2, b2, out_dtype=jnp.float32,
                                          with_pool=True)
        y2 = y2_full[:M, :out_c].reshape(N, H, W, out_c)
        pooled = pooled_full[:M // 2, :out_c].reshape(N, H, W // 2, out_c)
    else:
        # TODO(synk): odd-W pooling is plain JAX glue (PyTorch MaxPool2d((1,2))
        # floor-truncates the trailing column); the fused path needs even W.
        y2_full = fused_conv(p2, w2, b2, out_dtype=jnp.float32, with_pool=False)
        y2 = y2_full[:M, :out_c].reshape(N, H, W, out_c)
        wp = (W // 2) * 2
        pooled = jnp.maximum(y2[:, :, 0:wp:2, :], y2[:, :, 1:wp:2, :])

    x_out = jnp.transpose(y2, (0, 3, 1, 2))       # (N, out_c, H, W)
    p_out = jnp.transpose(pooled, (0, 3, 1, 2))   # (N, out_c, H, W//2)
    return x_out, p_out


# --------------------------------------------------------------------------
# Pure-JAX f32 reference (NCHW, same eval-mode BN) for correctness check
# --------------------------------------------------------------------------
def reference_forward(x, params, kernel_size=(3, 3)):
    kh, kw = kernel_size
    ph, pw = kh // 2, kw // 2

    def conv(x, w, b):
        y = lax.conv_general_dilated(
            x, w, window_strides=(1, 1), padding=((ph, ph), (pw, pw)),
            dimension_numbers=("NCHW", "OIHW", "NCHW"))
        return y + b[None, :, None, None]

    def bn(x, g, beta, m, v):
        return ((x - m[None, :, None, None])
                * (g[None, :, None, None]
                   / jnp.sqrt(v[None, :, None, None] + BN_EPS))
                + beta[None, :, None, None])

    y = jax.nn.relu(bn(conv(x, params["w1"], params["b1"]),
                       params["g1"], params["beta1"],
                       params["rm1"], params["rv1"]))
    y = jax.nn.relu(bn(conv(y, params["w2"], params["b2"]),
                       params["g2"], params["beta2"],
                       params["rm2"], params["rv2"]))
    wp = (y.shape[-1] // 2) * 2
    p = jnp.maximum(y[:, :, :, 0:wp:2], y[:, :, :, 1:wp:2])
    return y, p


# --------------------------------------------------------------------------
def make_params(key, in_c, out_c, kh, kw):
    ks = jax.random.split(key, 12)
    f32 = jnp.float32
    return {
        "w1": 0.1 * jax.random.normal(ks[0], (out_c, in_c, kh, kw), f32),
        "b1": 0.05 * jax.random.normal(ks[1], (out_c,), f32),
        "g1": 1.0 + 0.1 * jax.random.normal(ks[2], (out_c,), f32),
        "beta1": 0.05 * jax.random.normal(ks[3], (out_c,), f32),
        "rm1": 0.05 * jax.random.normal(ks[4], (out_c,), f32),
        "rv1": jax.random.uniform(ks[5], (out_c,), f32, 0.5, 1.5),
        "w2": 0.1 * jax.random.normal(ks[6], (out_c, out_c, kh, kw), f32),
        "b2": 0.05 * jax.random.normal(ks[7], (out_c,), f32),
        "g2": 1.0 + 0.1 * jax.random.normal(ks[8], (out_c,), f32),
        "beta2": 0.05 * jax.random.normal(ks[9], (out_c,), f32),
        "rm2": 0.05 * jax.random.normal(ks[10], (out_c,), f32),
        "rv2": jax.random.uniform(ks[11], (out_c,), f32, 0.5, 1.5),
    }


if __name__ == "__main__":
    key = jax.random.PRNGKey(0)
    k_x, k_p = jax.random.split(key)

    N, in_c, out_c = 2, 4, 8
    H, W = 8, 16
    kernel_size = (3, 3)

    x = jax.random.normal(k_x, (N, in_c, H, W), jnp.float32)   # NCHW, like PyTorch
    params = make_params(k_p, in_c, out_c, *kernel_size)

    x_out, p_out = encoder_block_forward(x, params, kernel_size=kernel_size)
    jax.block_until_ready((x_out, p_out))

    x_ref, p_ref = reference_forward(x, params, kernel_size=kernel_size)
    assert x_out.shape == (N, out_c, H, W)
    assert p_out.shape == (N, out_c, H, W // 2)
    # bf16 patch/weight matmuls (f32 accumulation) -> relaxed tolerances.
    err_x = float(jnp.max(jnp.abs(x_out - x_ref)))
    err_p = float(jnp.max(jnp.abs(p_out - p_ref)))
    assert jnp.allclose(x_out, x_ref, atol=8e-2, rtol=5e-2), err_x
    assert jnp.allclose(p_out, p_ref, atol=8e-2, rtol=5e-2), err_p

    print("KERNEL_OK")
</pallas_src>

<mosaic_0001>
module attributes {stable_mosaic.version = 11 : i64} {
  func.func @conv_bias_relu_kernel(%arg0: i32, %arg1: memref<128x36xbf16, #tpu.memory_space<vmem>>, %arg2: memref<36x128xbf16, #tpu.memory_space<vmem>>, %arg3: memref<1x128xf32, #tpu.memory_space<vmem>>, %arg4: memref<128x128xbf16, #tpu.memory_space<vmem>>) attributes {dimension_semantics = [#tpu.dimension_semantics<parallel>], iteration_bounds = array<i64: 2>, scalar_prefetch = 0 : i64, scratch_operands = 0 : i64, tpu.core_type = #tpu.core_type<tc>, window_params = [{transform_indices = @transform_0, window_bounds = array<i64: 128, 36>}, {pipeline_mode = #tpu.pipeline_mode<synchronous>, transform_indices = @transform_1, window_bounds = array<i64: 36, 128>}, {pipeline_mode = #tpu.pipeline_mode<synchronous>, transform_indices = @transform_2, window_bounds = array<i64: 1, 128>}, {transform_indices = @transform_3, window_bounds = array<i64: 128, 128>}]} {
    %c0 = arith.constant 0 : index
    %c0_0 = arith.constant 0 : index
    %0 = vector.load %arg1[%c0, %c0_0] : memref<128x36xbf16, #tpu.memory_space<vmem>>, vector<128x36xbf16>
    %c0_1 = arith.constant 0 : index
    %c0_2 = arith.constant 0 : index
    %1 = vector.load %arg2[%c0_1, %c0_2] : memref<36x128xbf16, #tpu.memory_space<vmem>>, vector<36x128xbf16>
    %cst = arith.constant dense<0.000000e+00> : vector<128x128xf32>
    %2 = tpu.matmul %0, %1, %cst {dimension_numbers = #tpu.dot_dimension_numbers<[1], [0], [0], [1], [0, 0, 1, 1], [], []>} : vector<128x36xbf16>, vector<36x128xbf16>, vector<128x128xf32> -> vector<128x128xf32>
    %c0_3 = arith.constant 0 : index
    %c0_4 = arith.constant 0 : index
    %3 = vector.load %arg3[%c0_3, %c0_4] : memref<1x128xf32, #tpu.memory_space<vmem>>, vector<1x128xf32>
    %4 = vector.broadcast %3 : vector<1x128xf32> to vector<128x128xf32>
    %5 = arith.addf %2, %4 : vector<128x128xf32>
    %cst_5 = arith.constant 0.000000e+00 : f32
    %6 = vector.broadcast %cst_5 : f32 to vector<128x128xf32>
    %7 = arith.maximumf %5, %6 : vector<128x128xf32>
    %8 = arith.truncf %7 : vector<128x128xf32> to vector<128x128xbf16>
    %c0_6 = arith.constant 0 : index
    %c0_7 = arith.constant 0 : index
    %9 = vector.load %arg4[%c0_6, %c0_7] : memref<128x128xbf16, #tpu.memory_space<vmem>>, vector<128x128xbf16>
    tpu.vector_store %arg4[%c0_6, %c0_7], %8 {strides = array<i32>} : memref<128x128xbf16, #tpu.memory_space<vmem>>, vector<128x128xbf16>,
    return
  }
  func.func @transform_0(%arg0: i32) -> (i32, i32) {
    %c0_i32 = arith.constant 0 : i32
    %c0_i32_0 = arith.constant 0 : i32
    return %arg0, %c0_i32 : i32, i32
  }
  func.func @transform_1(%arg0: i32) -> (i32, i32) {
    %c0_i32 = arith.constant 0 : i32
    %c0_i32_0 = arith.constant 0 : i32
    %c0_i32_1 = arith.constant 0 : i32
    return %c0_i32, %c0_i32_0 : i32, i32
  }
  func.func @transform_2(%arg0: i32) -> (i32, i32) {
    %c0_i32 = arith.constant 0 : i32
    %c0_i32_0 = arith.constant 0 : i32
    %c0_i32_1 = arith.constant 0 : i32
    return %c0_i32, %c0_i32_0 : i32, i32
  }
  func.func @transform_3(%arg0: i32) -> (i32, i32) {
    %c0_i32 = arith.constant 0 : i32
    %c0_i32_0 = arith.constant 0 : i32
    return %arg0, %c0_i32 : i32, i32
  }
}

module attributes {stable_mosaic.version = 11 : i64} {
  func.func @conv_bias_relu_pool_kernel(%arg0: i32, %arg1: memref<128x1152xbf16, #tpu.memory_space<vmem>>, %arg2: memref<1152x128xbf16, #tpu.memory_space<vmem>>, %arg3: memref<1x128xf32, #tpu.memory_space<vmem>>, %arg4: memref<128x128xf32, #tpu.memory_space<vmem>>, %arg5: memref<64x128xf32, #tpu.memory_space<vmem>>) attributes {dimension_semantics = [#tpu.dimension_semantics<parallel>], iteration_bounds = array<i64: 2>, scalar_prefetch = 0 : i64, scratch_operands = 0 : i64, tpu.core_type = #tpu.core_type<tc>, window_params = [{transform_indices = @transform_0, window_bounds = array<i64: 128, 1152>}, {pipeline_mode = #tpu.pipeline_mode<synchronous>, transform_indices = @transform_1, window_bounds = array<i64: 1152, 128>}, {pipeline_mode = #tpu.pipeline_mode<synchronous>, transform_indices = @transform_2, window_bounds = array<i64: 1, 128>}, {transform_indices = @transform_3, window_bounds = array<i64: 128, 128>}, {transform_indices = @transform_4, window_bounds = array<i64: 64, 128>}]} {
    %c0 = arith.constant 0 : index
    %c0_0 = arith.constant 0 : index
    %0 = vector.load %arg1[%c0, %c0_0] : memref<128x1152xbf16, #tpu.memory_space<vmem>>, vector<128x1152xbf16>
    %c0_1 = arith.constant 0 : index
    %c0_2 = arith.constant 0 : index
    %1 = vector.load %arg2[%c0_1, %c0_2] : memref<1152x128xbf16, #tpu.memory_space<vmem>>, vector<1152x128xbf16>
    %cst = arith.constant dense<0.000000e+00> : vector<128x128xf32>
    %2 = tpu.matmul %0, %1, %cst {dimension_numbers = #tpu.dot_dimension_numbers<[1], [0], [0], [1], [0, 0, 1, 1], [], []>} : vector<128x1152xbf16>, vector<1152x128xbf16>, vector<128x128xf32> -> vector<128x128xf32>
    %c0_3 = arith.constant 0 : index
    %c0_4 = arith.constant 0 : index
    %3 = vector.load %arg3[%c0_3, %c0_4] : memref<1x128xf32, #tpu.memory_space<vmem>>, vector<1x128xf32>
    %4 = vector.broadcast %3 : vector<1x128xf32> to vector<128x128xf32>
    %5 = arith.addf %2, %4 : vector<128x128xf32>
    %cst_5 = arith.constant 0.000000e+00 : f32
    %6 = vector.broadcast %cst_5 : f32 to vector<128x128xf32>
    %7 = arith.maximumf %5, %6 : vector<128x128xf32>
    %c0_6 = arith.constant 0 : index
    %c0_7 = arith.constant 0 : index
    %8 = vector.load %arg4[%c0_6, %c0_7] : memref<128x128xf32, #tpu.memory_space<vmem>>, vector<128x128xf32>
    tpu.vector_store %arg4[%c0_6, %c0_7], %7 {strides = array<i32>} : memref<128x128xf32, #tpu.memory_space<vmem>>, vector<128x128xf32>,
    %c0_8 = arith.constant 0 : index
    %c0_9 = arith.constant 0 : index
    %9 = tpu.strided_load %arg4[%c0_8, %c0_9] {strides = array<i32: 2, 1>} : memref<128x128xf32, #tpu.memory_space<vmem>>, vector<64x128xf32>
    %c1 = arith.constant 1 : index
    %c0_10 = arith.constant 0 : index
    %10 = tpu.strided_load %arg4[%c1, %c0_10] {strides = array<i32: 2, 1>} : memref<128x128xf32, #tpu.memory_space<vmem>>, vector<64x128xf32>
    %11 = arith.maximumf %9, %10 : vector<64x128xf32>
    %c0_11 = arith.constant 0 : index
    %c0_12 = arith.constant 0 : index
    %12 = vector.load %arg5[%c0_11, %c0_12] : memref<64x128xf32, #tpu.memory_space<vmem>>, vector<64x128xf32>
    tpu.vector_store %arg5[%c0_11, %c0_12], %11 {strides = array<i32>} : memref<64x128xf32, #tpu.memory_space<vmem>>, vector<64x128xf32>,
    return
  }
  func.func @transform_0(%arg0: i32) -> (i32, i32) {
    %c0_i32 = arith.constant 0 : i32
    %c0_i32_0 = arith.constant 0 : i32
    return %arg0, %c0_i32 : i32, i32
  }
  func.func @transform_1(%arg0: i32) -> (i32, i32) {
    %c0_i32 = arith.constant 0 : i32
    %c0_i32_0 = arith.constant 0 : i32
    %c0_i32_1 = arith.constant 0 : i32
    return %c0_i32, %c0_i32_0 : i32, i32
  }
  func.func @transform_2(%arg0: i32) -> (i32, i32) {
    %c0_i32 = arith.constant 0 : i32
    %c0_i32_0 = arith.constant 0 : i32
    %c0_i32_1 = arith.constant 0 : i32
    return %c0_i32, %c0_i32_0 : i32, i32
  }
  func.func @transform_3(%arg0: i32) -> (i32, i32) {
    %c0_i32 = arith.constant 0 : i32
    %c0_i32_0 = arith.constant 0 : i32
    return %arg0, %c0_i32 : i32, i32
  }
  func.func @transform_4(%arg0: i32) -> (i32, i32) {
    %c0_i32 = arith.constant 0 : i32
    %c0_i32_0 = arith.constant 0 : i32
    return %arg0, %c0_i32 : i32, i32
  }
}

</mosaic_0001>

<llo_original>
// kernel: encoder_block_forward.2
$region0: #{encoder_block_forward.2}
  #allocation0 [shape = 'u32[]', space=smem, size = 0x4, offset = 0x4, fixed_abs, tag = 'smem constant byte address 0x4 - core index']
  #allocation1 [shape = 'u32[72,128]{1,0:T(1,128)}', space=vmem, size = 0x9000, scoped, tag = 'internal scratch']
  %s0 = inlined_call_operand.vmem [shape: bf16[256,36], index: 0, kind: input, shape index: {}]
  %s1 = inlined_call_operand.vmem [shape: bf16[36,128], index: 1, kind: input, shape index: {}]
  %s2 = inlined_call_operand.vmem [shape: f32[1,128], index: 2, kind: input, shape index: {}]
  %s3 = inlined_call_operand.vmem [shape: bf16[256,128], index: 3, kind: output, shape index: {}]
  %s4 = sld [smem:[#allocation0]]
  $region45: #{encoder_block_forward.2} parent=0
    _
  %s6 = ssub.s32 1, %s4
  %s7 = scalar_select 0, %s6, %s4
  loop: start=0, step=1, limit=4
  $region2: #{encoder_block_forward.2} parent=0 // loop_pre_header
    _
  $region3: #{encoder_block_forward.2} parent=0 // loop_header
    %s9 = sphi 0, %s13
    %p10 = scmp.ge.s32.totalorder %s9, 4
    %s19 = sphi 0, %s21
    %s22 = sphi 0, %s19
    %s23 = sphi 0, %s22
    %s39 = sphi 0, %s23
    %s43 = sphi 0, %s43
    %s45 = sphi 0, %s43
    %s46 = sphi 0, %s45
    %s60 = sphi 0, %s46
    %s64 = sphi 0, %s64
    %s66 = sphi 0, %s64
    %s67 = sphi 0, %s66
    %s81 = sphi 0, %s67
    %s87 = sphi 0, %s89
    %s90 = sphi 0, %s87
    %s91 = sphi 0, %s90
    %s107 = sphi 0, %s91
  $region4: #{encoder_block_forward.2} parent=0 // loop_header_branch
    %12 = sbr.rel (%p10) target = $region8
  $region5: #{encoder_block_forward.2} parent=0 // loop_body
    %s14 = ssub.s32 %s9, 1
    %s15 = ssub.s32 %s9, 2
    %s16 = sadd.s32 %s9, 1
    %s17 = ssub.s32 %s9, %s16
    %p18 = scmp.eq.s32.totalorder %s17, 0
    %s20 = sadd.s32 %s19, 1
    %s21 = scalar_select %p18, %s19, %s20
    %p24 = pneg %p18
    %p25 = scmp.eq.s32.totalorder %s9, 1
    %p26 = por %p24, %p25
    %p27 = scmp.ne.s32.totalorder %s19, %s22
    %p28 = scmp.eq.s32.totalorder %s9, 0
    %p29 = por %p27, %p28
    %p30 = scmp.ne.s32.totalorder %s19, %s22
    %p31 = scmp.eq.s32.totalorder %s14, 1
    %p32 = por %p30, %p31
    %p33 = scmp.ne.s32.totalorder %s22, %s23
    %p34 = scmp.eq.s32.totalorder %s14, 0
    %p35 = por %p33, %p34
    %p36 = scmp.ne.s32.totalorder %s22, %s23
    %p37 = scmp.eq.s32.totalorder %s15, 1
    %p38 = por %p36, %p37
    %p40 = scmp.ne.s32.totalorder %s23, %s39
    %p41 = scmp.eq.s32.totalorder %s15, 0
    %p42 = por %p40, %p41
    %s44 = sadd.s32 %s43, 1
    %p47 = scmp.eq.s32.totalorder %s9, 1
    %p48 = scmp.ne.s32.totalorder %s43, %s45
    %p49 = scmp.eq.s32.totalorder %s9, 0
    %p50 = por %p48, %p49
    %p51 = scmp.ne.s32.totalorder %s43, %s45
    %p52 = scmp.eq.s32.totalorder %s14, 1
    %p53 = por %p51, %p52
    %p54 = scmp.ne.s32.totalorder %s45, %s46
    %p55 = scmp.eq.s32.totalorder %s14, 0
    %p56 = por %p54, %p55
    %p57 = scmp.ne.s32.totalorder %s45, %s46
    %p58 = scmp.eq.s32.totalorder %s15, 1
    %p59 = por %p57, %p58
    %p61 = scmp.ne.s32.totalorder %s46, %s60
    %p62 = scmp.eq.s32.totalorder %s15, 0
    %p63 = por %p61, %p62
    %s65 = sadd.s32 %s64, 1
    %p68 = scmp.eq.s32.totalorder %s9, 1
    %p69 = scmp.ne.s32.totalorder %s64, %s66
    %p70 = scmp.eq.s32.totalorder %s9, 0
    %p71 = por %p69, %p70
    %p72 = scmp.ne.s32.totalorder %s64, %s66
    %p73 = scmp.eq.s32.totalorder %s14, 1
    %p74 = por %p72, %p73
    %p75 = scmp.ne.s32.totalorder %s66, %s67
    %p76 = scmp.eq.s32.totalorder %s14, 0
    %p77 = por %p75, %p76
    %p78 = scmp.ne.s32.totalorder %s66, %s67
    %p79 = scmp.eq.s32.totalorder %s15, 1
    %p80 = por %p78, %p79
    %p82 = scmp.ne.s32.totalorder %s67, %s81
    %p83 = scmp.eq.s32.totalorder %s15, 0
    %p84 = por %p82, %p83
    %s85 = ssub.s32 %s9, %s16
    %p86 = scmp.eq.s32.totalorder %s85, 0
    %s88 = sadd.s32 %s87, 1
    %s89 = scalar_select %p86, %s87, %s88
    %p92 = pneg %p86
    %p93 = scmp.eq.s32.totalorder %s9, 1
    %p94 = por %p92, %p93
    %p95 = scmp.ne.s32.totalorder %s87, %s90
    %p96 = scmp.eq.s32.totalorder %s9, 0
    %p97 = por %p95, %p96
    %p98 = scmp.ne.s32.totalorder %s87, %s90
    %p99 = scmp.eq.s32.totalorder %s14, 1
    %p100 = por %p98, %p99
    %p101 = scmp.ne.s32.totalorder %s90, %s91
    %p102 = scmp.eq.s32.totalorder %s14, 0
    %p103 = por %p101, %p102
    %p104 = scmp.ne.s32.totalorder %s90, %s91
    %p105 = scmp.eq.s32.totalorder %s15, 1
    %p106 = por %p104, %p105
    %p108 = scmp.ne.s32.totalorder %s91, %s107
    %p109 = scmp.eq.s32.totalorder %s15, 0
    %p110 = por %p108, %p109
    %p111 = scmp.le.s32.totalorder 1, %s9
    %p112 = scmp.lt.s32.totalorder %s9, 3
    %p113 = pnand %p111, %p112
    %p114 = pneg %p113
    // Predicated region
    $region9: #{encoder_block_forward.2} parent=5 // pred_check
      _
    $region10: #{encoder_block_forward.2} parent=5 // pred_check_branch
      %116 = sbr.rel (%p113) target = $region12
    $region11: #{encoder_block_forward.2} parent=5 // pred_region
      %s117 = ssub.s32 %s9, 1
      // Predicated region
      $region13: #{encoder_block_forward.2} parent=11 // pred_check
        %p118 = pneg %p56
      $region14: #{encoder_block_forward.2} parent=11 // pred_check_branch
        %120 = sbr.rel (%p118) target = $region16
      $region15: #{encoder_block_forward.2} parent=11 // pred_region
        _
      $region16: #{encoder_block_forward.2} parent=11 // pred_fallthru
        _
      // Predicated region
      $region17: #{encoder_block_forward.2} parent=11 // pred_check
        %p121 = pneg %p77
      $region18: #{encoder_block_forward.2} parent=11 // pred_check_branch
        %123 = sbr.rel (%p121) target = $region20
      $region19: #{encoder_block_forward.2} parent=11 // pred_region
        _
      $region20: #{encoder_block_forward.2} parent=11 // pred_fallthru
        _
    $region12: #{encoder_block_forward.2} parent=5 // pred_fallthru
      _
    %p124 = scmp.lt.s32.totalorder %s9, 2
    // Predicated region
    $region21: #{encoder_block_forward.2} parent=5 // pred_check
      %p125 = pneg %p124
    $region22: #{encoder_block_forward.2} parent=5 // pred_check_branch
      %127 = sbr.rel (%p125) target = $region24
    $region23: #{encoder_block_forward.2} parent=5 // pred_region
      // Predicated region
      $region25: #{encoder_block_forward.2} parent=23 // pred_check
        %p128 = pneg %p29
      $region26: #{encoder_block_forward.2} parent=23 // pred_check_branch
        %130 = sbr.rel (%p128) target = $region28
      $region27: #{encoder_block_forward.2} parent=23 // pred_region
        %s131 = smul.u32 16, %s9
        %p132 = scmp.lt.s32.totalorder %s131, 31
        %s133 = scalar_select %p132, %s131, 31
        %s134 = smul.addr %s133, 4
        %s135 = scalar_lea.vmem %s0, %s134
        %s136 = smul.u32 16, %s9
      $region28: #{encoder_block_forward.2} parent=23 // pred_fallthru
        _
    $region24: #{encoder_block_forward.2} parent=5 // pred_fallthru
      _
    %p137 = scmp.le.s32.totalorder 1, %s9
    %p138 = scmp.lt.s32.totalorder %s9, 3
    %p139 = pnand %p137, %p138
    %p140 = pneg %p139
    // Predicated region
    $region29: #{encoder_block_forward.2} parent=5 // pred_check
      _
    $region30: #{encoder_block_forward.2} parent=5 // pred_check_branch
      %142 = sbr.rel (%p139) target = $region32
    $region31: #{encoder_block_forward.2} parent=5 // pred_region
      %s143 = ssub.s32 %s9, 1
      %s144 = smul.u32 16, %s14
      %p145 = scmp.lt.s32.totalorder %s144, 31
      %s146 = scalar_select %p145, %s144, 31
      %s147 = smul.addr %s146, 4
      %s148 = scalar_lea.vmem %s0, %s147
      %p149 = pneg %p35
      %p150 = pneg %p32
      %p151 = pneg %p56
      %p152 = pneg %p53
      %p153 = pneg %p77
      %p154 = pneg %p74
      %p155 = pneg %p103
      %p156 = pneg %p100
      %s157 = smul.u32 16, %s14
      %p158 = scmp.lt.s32.totalorder %s157, 31
      %s159 = scalar_select %p158, %s157, 31
      %s160 = smul.addr %s159, 4
      %s161 = scalar_lea.vmem %s3, %s160
      %s162 = smul.u32 16, %s14
      %p163 = scmp.lt.s32.totalorder %s162, 31
      %s164 = scalar_select %p163, %s162, 31
      %s165 = smul.addr %s164, 4
      %s166 = scalar_lea.vmem %s0, %s165
      %s167 = smul.u32 16, %s14
      %s168 = smul.u32 16, %s14
      %p169 = scmp.lt.s32.totalorder %s168, 31
      %s170 = scalar_select %p169, %s168, 31
      %s171 = smul.addr %s170, 4
      %s172 = scalar_lea.vmem %s3, %s171
      %s173 = smul.u32 16, %s14
      %v175 = vld [vmem:[%s166] sm:$0xf]
      %v176 = vld [vmem:[%s166 + $0x4] sm:$0xf]
      %v177 = vld [vmem:[%s166 + $0x8] sm:$0xf]
      %v178 = vld [vmem:[%s166 + $0xc] sm:$0xf]
      %v179 = vld [vmem:[%s166 + $0x10] sm:$0xf]
      %v180 = vld [vmem:[%s166 + $0x14] sm:$0xf]
      %v181 = vld [vmem:[%s166 + $0x18] sm:$0xf]
      %v182 = vld [vmem:[%s166 + $0x1c] sm:$0xf]
      %v183 = vld [vmem:[%s166 + $0x20] sm:$0xf]
      %v184 = vld [vmem:[%s166 + $0x24] sm:$0xf]
      %v185 = vld [vmem:[%s166 + $0x28] sm:$0xf]
      %v186 = vld [vmem:[%s166 + $0x2c] sm:$0xf]
      %v187 = vld [vmem:[%s166 + $0x30] sm:$0xf]
      %v188 = vld [vmem:[%s166 + $0x34] sm:$0xf]
      %v189 = vld [vmem:[%s166 + $0x38] sm:$0xf]
      %v190 = vld [vmem:[%s166 + $0x3c] sm:$0xf]
      %v191 = vld [vmem:[%s1] sm:$0xf]
      %v192 = vld [vmem:[%s1 + $0x4] sm:$0xf]
      %v193 = vld [vmem:[%s1 + $0x8] sm:$0xf]
      %v194 = vld [vmem:[%s1 + $0xc] sm:$0xf]
      %v195 = vld [vmem:[%s1 + $0x10] sm:$0x3]
      %v196 = vld [vmem:[%s2] sm:$0x1]
      %v198 = vperm.slane %v196, 0
      %v216 = vunpack.c.l.b16 %v175
      %v217 = vunpack.c.l.b16 %v176
      %v218 = vunpack.c.l.b16 %v177
      %v219 = vunpack.c.l.b16 %v178
      %v220 = vunpack.c.l.b16 %v179
      %v221 = vunpack.c.l.b16 %v180
      %v222 = vunpack.c.l.b16 %v181
      %v223 = vunpack.c.l.b16 %v182
      %v224 = vunpack.c.l.b16 %v183
      %v225 = vunpack.c.l.b16 %v184
      %v226 = vunpack.c.l.b16 %v185
      %v227 = vunpack.c.l.b16 %v186
      %v228 = vunpack.c.l.b16 %v187
      %v229 = vunpack.c.l.b16 %v188
      %v230 = vunpack.c.l.b16 %v189
      %v231 = vunpack.c.l.b16 %v190
      %v232 = vpack.c.b16 %v217, %v216
      %v233 = vpack.c.b16 %v219, %v218
      %v234 = vpack.c.b16 %v221, %v220
      %v235 = vpack.c.b16 %v223, %v222
      %v236 = vpack.c.b16 %v225, %v224
      %v237 = vpack.c.b16 %v227, %v226
      %v238 = vpack.c.b16 %v229, %v228
      %v239 = vpack.c.b16 %v231, %v230
      %v245 = vunpack.c.l.b16 %v191
      %v246 = vunpack.c.l.b16 %v192
      %v247 = vunpack.c.l.b16 %v193
      %v248 = vunpack.c.l.b16 %v194
      %v249 = vunpack.c.l.b16 %v195
      %v250 = vpack.c.b16 %v246, %v245
      %v251 = vpack.c.b16 %v248, %v247
      %v252 = vpack.c.b16 %v249, %v249
      %vm255 = vcmask 293888
      %v257 = vsel %vm255, %v232, 0
      %v260 = vsel %vm255, %v233, 0
      %v263 = vsel %vm255, %v234, 0
      %v266 = vsel %vm255, %v235, 0
      %v269 = vsel %vm255, %v236, 0
      %v272 = vsel %vm255, %v237, 0
      %v275 = vsel %vm255, %v238, 0
      %v278 = vsel %vm255, %v239, 0
      %vm280 = vcmask 1041408
      %v282 = vsel %vm280, %v252, 0
      %284 = vmatpush.bf16.msra.mxu0 0
      %285 = vmatpush.bf16.msra.mxu0 0
      %286 = vmatpush.bf16.msra.mxu0 0
      %287 = vmatpush.bf16.msra.mxu0 0
      %288 = vmatpush.bf16.msra.mxu0 0
      %289 = vmatpush.bf16.msra.mxu0 %v282
      %290 = vmatpush.bf16.msra.mxu0 %v251
      %291 = vmatpush.bf16.msra.mxu0 %v250
      %292 = vmatmul.bf16.gmra.mxu0 %v257
      %v293 = vpop.f32.mrf.mxu0
      %v294 = vadd.f32 %v198, %v293
      %v295 = vpop.f32.mrf.mxu0
      %v296 = vadd.f32 %v198, %v295
      %297 = vmatmul.bf16.gmra.mxu0 %v260
      %v298 = vpop.f32.mrf.mxu0
      %v299 = vadd.f32 %v198, %v298
      %v300 = vpop.f32.mrf.mxu0
      %v301 = vadd.f32 %v198, %v300
      %302 = vmatmul.bf16.gmra.mxu0 %v263
      %v303 = vpop.f32.mrf.mxu0
      %v304 = vadd.f32 %v198, %v303
      %v305 = vpop.f32.mrf.mxu0
      %v306 = vadd.f32 %v198, %v305
      %307 = vmatmul.bf16.gmra.mxu0 %v266
      %v308 = vpop.f32.mrf.mxu0
      %v309 = vadd.f32 %v198, %v308
      %v310 = vpop.f32.mrf.mxu0
      %v311 = vadd.f32 %v198, %v310
      %312 = vmatmul.bf16.gmra.mxu0 %v269
      %v313 = vpop.f32.mrf.mxu0
      %v314 = vadd.f32 %v198, %v313
      %v315 = vpop.f32.mrf.mxu0
      %v316 = vadd.f32 %v198, %v315
      %317 = vmatmul.bf16.gmra.mxu0 %v272
      %v318 = vpop.f32.mrf.mxu0
      %v319 = vadd.f32 %v198, %v318
      %v320 = vpop.f32.mrf.mxu0
      %v321 = vadd.f32 %v198, %v320
      %322 = vmatmul.bf16.gmra.mxu0 %v275
      %v323 = vpop.f32.mrf.mxu0
      %v324 = vadd.f32 %v198, %v323
      %v325 = vpop.f32.mrf.mxu0
      %v326 = vadd.f32 %v198, %v325
      %327 = vmatmul.bf16.gmra.mxu0 %v278
      %v328 = vpop.f32.mrf.mxu0
      %v329 = vadd.f32 %v198, %v328
      %v330 = vpop.f32.mrf.mxu0
      %v331 = vadd.f32 %v198, %v330
      %332 = vdwg.mxu0
      %v333 = vmax.f32 %v294, 0.0
      %v334 = vmax.f32 %v296, 0.0
      %v335 = vmax.f32 %v299, 0.0
      %v336 = vmax.f32 %v301, 0.0
      %v337 = vmax.f32 %v304, 0.0
      %v338 = vmax.f32 %v306, 0.0
      %v339 = vmax.f32 %v309, 0.0
      %v340 = vmax.f32 %v311, 0.0
      %v341 = vmax.f32 %v314, 0.0
      %v342 = vmax.f32 %v316, 0.0
      %v343 = vmax.f32 %v319, 0.0
      %v344 = vmax.f32 %v321, 0.0
      %v345 = vmax.f32 %v324, 0.0
      %v346 = vmax.f32 %v326, 0.0
      %v347 = vmax.f32 %v329, 0.0
      %v348 = vmax.f32 %v331, 0.0
      %v349 = vpack.c.bf16 %v333, %v333
      %v350 = vpack.c.bf16 %v334, %v334
      %v351 = vpack.c.bf16 %v335, %v335
      %v352 = vpack.c.bf16 %v336, %v336
      %v353 = vpack.c.bf16 %v337, %v337
      %v354 = vpack.c.bf16 %v338, %v338
      %v355 = vpack.c.bf16 %v339, %v339
      %v356 = vpack.c.bf16 %v340, %v340
      %v357 = vpack.c.bf16 %v341, %v341
      %v358 = vpack.c.bf16 %v342, %v342
      %v359 = vpack.c.bf16 %v343, %v343
      %v360 = vpack.c.bf16 %v344, %v344
      %v361 = vpack.c.bf16 %v345, %v345
      %v362 = vpack.c.bf16 %v346, %v346
      %v363 = vpack.c.bf16 %v347, %v347
      %v364 = vpack.c.bf16 %v348, %v348
      %365 = vst [vmem:[%s172] sm:$0xf] %v349
      %366 = vst [vmem:[%s172 + $0x4] sm:$0xf] %v350
      %367 = vst [vmem:[%s172 + $0x8] sm:$0xf] %v351
      %368 = vst [vmem:[%s172 + $0xc] sm:$0xf] %v352
      %369 = vst [vmem:[%s172 + $0x10] sm:$0xf] %v353
      %370 = vst [vmem:[%s172 + $0x14] sm:$0xf] %v354
      %371 = vst [vmem:[%s172 + $0x18] sm:$0xf] %v355
      %372 = vst [vmem:[%s172 + $0x1c] sm:$0xf] %v356
      %373 = vst [vmem:[%s172 + $0x20] sm:$0xf] %v357
      %374 = vst [vmem:[%s172 + $0x24] sm:$0xf] %v358
      %375 = vst [vmem:[%s172 + $0x28] sm:$0xf] %v359
      %376 = vst [vmem:[%s172 + $0x2c] sm:$0xf] %v360
      %377 = vst [vmem:[%s172 + $0x30] sm:$0xf] %v361
      %378 = vst [vmem:[%s172 + $0x34] sm:$0xf] %v362
      %379 = vst [vmem:[%s172 + $0x38] sm:$0xf] %v363
      %380 = vst [vmem:[%s172 + $0x3c] sm:$0xf] %v364
      %s381 = smul.u32 16, %s14
      %p382 = scmp.lt.s32.totalorder %s381, 31
      %s383 = scalar_select %p382, %s381, 31
      %s384 = smul.addr %s383, 4
      %s385 = scalar_lea.vmem %s3, %s384
      // Predicated region
      $region33: #{encoder_block_forward.2} parent=31 // pred_check
        %p386 = pneg %p100
      $region34: #{encoder_block_forward.2} parent=31 // pred_check_branch
        %388 = sbr.rel (%p386) target = $region36
      $region35: #{encoder_block_forward.2} parent=31 // pred_region
        %s389 = smul.u32 16, %s14
      $region36: #{encoder_block_forward.2} parent=31 // pred_fallthru
        _
    $region32: #{encoder_block_forward.2} parent=5 // pred_fallthru
      _
    %p390 = scmp.le.s32.totalorder 2, %s9
    // Predicated region
    $region37: #{encoder_block_forward.2} parent=5 // pred_check
      %p391 = pneg %p390
    $region38: #{encoder_block_forward.2} parent=5 // pred_check_branch
      %393 = sbr.rel (%p391) target = $region40
    $region39: #{encoder_block_forward.2} parent=5 // pred_region
      %s394 = ssub.s32 %s9, 2
      // Predicated region
      $region41: #{encoder_block_forward.2} parent=39 // pred_check
        %p395 = pneg %p106
      $region42: #{encoder_block_forward.2} parent=39 // pred_check_branch
        %397 = sbr.rel (%p395) target = $region44
      $region43: #{encoder_block_forward.2} parent=39 // pred_region
        %s398 = smul.u32 16, %s15
        %p399 = scmp.lt.s32.totalorder %s398, 31
        %s400 = scalar_select %p399, %s398, 31
        %s401 = smul.addr %s400, 4
        %s402 = scalar_lea.vmem %s3, %s401
      $region44: #{encoder_block_forward.2} parent=39 // pred_fallthru
        _
    $region40: #{encoder_block_forward.2} parent=5 // pred_fallthru
      _
  $region6: #{encoder_block_forward.2} parent=0 // loop_footer
    %s13 = sadd.s32 1, %s9
  $region7: #{encoder_block_forward.2} parent=0 // loop_footer_branch
    %8 = sbr.rel target = $region3
  $region8: #{encoder_block_forward.2} parent=0 // loop_exit
    _

// kernel: encoder_block_forward.3
$region0: #{encoder_block_forward.3}
  #allocation0 [shape = 'u32[]', space=smem, size = 0x4, offset = 0x4, fixed_abs, tag = 'smem constant byte address 0x4 - core index']
  #allocation1 [shape = 'u32[72,128]{1,0:T(1,128)}', space=vmem, size = 0x9000, scoped, tag = 'internal scratch']
  %s0 = inlined_call_operand.vmem [shape: bf16[256,1152], index: 0, kind: input, shape index: {}]
  %s1 = inlined_call_operand.vmem [shape: bf16[1152,128], index: 1, kind: input, shape index: {}]
  %s2 = inlined_call_operand.vmem [shape: f32[1,128], index: 2, kind: input, shape index: {}]
  %s3 = inlined_call_operand.vmem [shape: f32[256,128], index: 3, kind: output, shape index: {0}]
  %s4 = inlined_call_operand.vmem [shape: f32[128,128], index: 4, kind: output, shape index: {1}]
  %5 = xla_tuple %s3, %s4
  %s6 = sld [smem:[#allocation0]]
  $region53: #{encoder_block_forward.3} parent=0
    _
  %s8 = ssub.s32 1, %s6
  %s9 = scalar_select 0, %s8, %s6
  loop: start=0, step=1, limit=4
  $region2: #{encoder_block_forward.3} parent=0 // loop_pre_header
    _
  $region3: #{encoder_block_forward.3} parent=0 // loop_header
    %s11 = sphi 0, %s15
    %p12 = scmp.ge.s32.totalorder %s11, 4
    %s21 = sphi 0, %s23
    %s24 = sphi 0, %s21
    %s25 = sphi 0, %s24
    %s41 = sphi 0, %s25
    %s45 = sphi 0, %s45
    %s47 = sphi 0, %s45
    %s48 = sphi 0, %s47
    %s62 = sphi 0, %s48
    %s66 = sphi 0, %s66
    %s68 = sphi 0, %s66
    %s69 = sphi 0, %s68
    %s83 = sphi 0, %s69
    %s89 = sphi 0, %s91
    %s92 = sphi 0, %s89
    %s93 = sphi 0, %s92
    %s109 = sphi 0, %s93
    %s115 = sphi 0, %s117
    %s118 = sphi 0, %s115
    %s119 = sphi 0, %s118
    %s135 = sphi 0, %s119
  $region4: #{encoder_block_forward.3} parent=0 // loop_header_branch
    %14 = sbr.rel (%p12) target = $region8
  $region5: #{encoder_block_forward.3} parent=0 // loop_body
    %s16 = ssub.s32 %s11, 1
    %s17 = ssub.s32 %s11, 2
    %s18 = sadd.s32 %s11, 1
    %s19 = ssub.s32 %s11, %s18
    %p20 = scmp.eq.s32.totalorder %s19, 0
    %s22 = sadd.s32 %s21, 1
    %s23 = scalar_select %p20, %s21, %s22
    %p26 = pneg %p20
    %p27 = scmp.eq.s32.totalorder %s11, 1
    %p28 = por %p26, %p27
    %p29 = scmp.ne.s32.totalorder %s21, %s24
    %p30 = scmp.eq.s32.totalorder %s11, 0
    %p31 = por %p29, %p30
    %p32 = scmp.ne.s32.totalorder %s21, %s24
    %p33 = scmp.eq.s32.totalorder %s16, 1
    %p34 = por %p32, %p33
    %p35 = scmp.ne.s32.totalorder %s24, %s25
    %p36 = scmp.eq.s32.totalorder %s16, 0
    %p37 = por %p35, %p36
    %p38 = scmp.ne.s32.totalorder %s24, %s25
    %p39 = scmp.eq.s32.totalorder %s17, 1
    %p40 = por %p38, %p39
    %p42 = scmp.ne.s32.totalorder %s25, %s41
    %p43 = scmp.eq.s32.totalorder %s17, 0
    %p44 = por %p42, %p43
    %s46 = sadd.s32 %s45, 1
    %p49 = scmp.eq.s32.totalorder %s11, 1
    %p50 = scmp.ne.s32.totalorder %s45, %s47
    %p51 = scmp.eq.s32.totalorder %s11, 0
    %p52 = por %p50, %p51
    %p53 = scmp.ne.s32.totalorder %s45, %s47
    %p54 = scmp.eq.s32.totalorder %s16, 1
    %p55 = por %p53, %p54
    %p56 = scmp.ne.s32.totalorder %s47, %s48
    %p57 = scmp.eq.s32.totalorder %s16, 0
    %p58 = por %p56, %p57
    %p59 = scmp.ne.s32.totalorder %s47, %s48
    %p60 = scmp.eq.s32.totalorder %s17, 1
    %p61 = por %p59, %p60
    %p63 = scmp.ne.s32.totalorder %s48, %s62
    %p64 = scmp.eq.s32.totalorder %s17, 0
    %p65 = por %p63, %p64
    %s67 = sadd.s32 %s66, 1
    %p70 = scmp.eq.s32.totalorder %s11, 1
    %p71 = scmp.ne.s32.totalorder %s66, %s68
    %p72 = scmp.eq.s32.totalorder %s11, 0
    %p73 = por %p71, %p72
    %p74 = scmp.ne.s32.totalorder %s66, %s68
    %p75 = scmp.eq.s32.totalorder %s16, 1
    %p76 = por %p74, %p75
    %p77 = scmp.ne.s32.totalorder %s68, %s69
    %p78 = scmp.eq.s32.totalorder %s16, 0
    %p79 = por %p77, %p78
    %p80 = scmp.ne.s32.totalorder %s68, %s69
    %p81 = scmp.eq.s32.totalorder %s17, 1
    %p82 = por %p80, %p81
    %p84 = scmp.ne.s32.totalorder %s69, %s83
    %p85 = scmp.eq.s32.totalorder %s17, 0
    %p86 = por %p84, %p85
    %s87 = ssub.s32 %s11, %s18
    %p88 = scmp.eq.s32.totalorder %s87, 0
    %s90 = sadd.s32 %s89, 1
    %s91 = scalar_select %p88, %s89, %s90
    %p94 = pneg %p88
    %p95 = scmp.eq.s32.totalorder %s11, 1
    %p96 = por %p94, %p95
    %p97 = scmp.ne.s32.totalorder %s89, %s92
    %p98 = scmp.eq.s32.totalorder %s11, 0
    %p99 = por %p97, %p98
    %p100 = scmp.ne.s32.totalorder %s89, %s92
    %p101 = scmp.eq.s32.totalorder %s16, 1
    %p102 = por %p100, %p101
    %p103 = scmp.ne.s32.totalorder %s92, %s93
    %p104 = scmp.eq.s32.totalorder %s16, 0
    %p105 = por %p103, %p104
    %p106 = scmp.ne.s32.totalorder %s92, %s93
    %p107 = scmp.eq.s32.totalorder %s17, 1
    %p108 = por %p106, %p107
    %p110 = scmp.ne.s32.totalorder %s93, %s109
    %p111 = scmp.eq.s32.totalorder %s17, 0
    %p112 = por %p110, %p111
    %s113 = ssub.s32 %s11, %s18
    %p114 = scmp.eq.s32.totalorder %s113, 0
    %s116 = sadd.s32 %s115, 1
    %s117 = scalar_select %p114, %s115, %s116
    %p120 = pneg %p114
    %p121 = scmp.eq.s32.totalorder %s11, 1
    %p122 = por %p120, %p121
    %p123 = scmp.ne.s32.totalorder %s115, %s118
    %p124 = scmp.eq.s32.totalorder %s11, 0
    %p125 = por %p123, %p124
    %p126 = scmp.ne.s32.totalorder %s115, %s118
    %p127 = scmp.eq.s32.totalorder %s16, 1
    %p128 = por %p126, %p127
    %p129 = scmp.ne.s32.totalorder %s118, %s119
    %p130 = scmp.eq.s32.totalorder %s16, 0
    %p131 = por %p129, %p130
    %p132 = scmp.ne.s32.totalorder %s118, %s119
    %p133 = scmp.eq.s32.totalorder %s17, 1
    %p134 = por %p132, %p133
    %p136 = scmp.ne.s32.totalorder %s119, %s135
    %p137 = scmp.eq.s32.totalorder %s17, 0
    %p138 = por %p136, %p137
    %p139 = scmp.le.s32.totalorder 1, %s11
    %p140 = scmp.lt.s32.totalorder %s11, 3
    %p141 = pnand %p139, %p140
    %p142 = pneg %p141
    // Predicated region
    $region9: #{encoder_block_forward.3} parent=5 // pred_check
      _
    $region10: #{encoder_block_forward.3} parent=5 // pred_check_branch
      %144 = sbr.rel (%p141) target = $region12
    $region11: #{encoder_block_forward.3} parent=5 // pred_region
      %s145 = ssub.s32 %s11, 1
      // Predicated region
      $region13: #{encoder_block_forward.3} parent=11 // pred_check
        %p146 = pneg %p58
      $region14: #{encoder_block_forward.3} parent=11 // pred_check_branch
        %148 = sbr.rel (%p146) target = $region16
      $region15: #{encoder_block_forward.3} parent=11 // pred_region
        _
      $region16: #{encoder_block_forward.3} parent=11 // pred_fallthru
        _
      // Predicated region
      $region17: #{encoder_block_forward.3} parent=11 // pred_check
        %p149 = pneg %p79
      $region18: #{encoder_block_forward.3} parent=11 // pred_check_branch
        %151 = sbr.rel (%p149) target = $region20
      $region19: #{encoder_block_forward.3} parent=11 // pred_region
        _
      $region20: #{encoder_block_forward.3} parent=11 // pred_fallthru
        _
    $region12: #{encoder_block_forward.3} parent=5 // pred_fallthru
      _
    %p152 = scmp.lt.s32.totalorder %s11, 2
    // Predicated region
    $region21: #{encoder_block_forward.3} parent=5 // pred_check
      %p153 = pneg %p152
    $region22: #{encoder_block_forward.3} parent=5 // pred_check_branch
      %155 = sbr.rel (%p153) target = $region24
    $region23: #{encoder_block_forward.3} parent=5 // pred_region
      // Predicated region
      $region25: #{encoder_block_forward.3} parent=23 // pred_check
        %p156 = pneg %p31
      $region26: #{encoder_block_forward.3} parent=23 // pred_check_branch
        %158 = sbr.rel (%p156) target = $region28
      $region27: #{encoder_block_forward.3} parent=23 // pred_region
        %s159 = smul.u32 16, %s11
        %p160 = scmp.lt.s32.totalorder %s159, 31
        %s161 = scalar_select %p160, %s159, 31
        %s162 = smul.addr %s161, 9
        %s163 = smul.addr %s162, 4
        %s164 = scalar_lea.vmem %s0, %s163
        %s165 = smul.u32 16, %s11
      $region28: #{encoder_block_forward.3} parent=23 // pred_fallthru
        _
    $region24: #{encoder_block_forward.3} parent=5 // pred_fallthru
      _
    %p166 = scmp.le.s32.totalorder 1, %s11
    %p167 = scmp.lt.s32.totalorder %s11, 3
    %p168 = pnand %p166, %p167
    %p169 = pneg %p168
    // Predicated region
    $region29: #{encoder_block_forward.3} parent=5 // pred_check
      _
    $region30: #{encoder_block_forward.3} parent=5 // pred_check_branch
      %171 = sbr.rel (%p168) target = $region32
    $region31: #{encoder_block_forward.3} parent=5 // pred_region
      %s172 = ssub.s32 %s11, 1
      %s173 = smul.u32 16, %s16
      %p174 = scmp.lt.s32.totalorder %s173, 31
      %s175 = scalar_select %p174, %s173, 31
      %s176 = smul.addr %s175, 9
      %s177 = smul.addr %s176, 4
      %s178 = scalar_lea.vmem %s0, %s177
      %p179 = pneg %p37
      %p180 = pneg %p34
      %p181 = pneg %p58
      %p182 = pneg %p55
      %p183 = pneg %p79
      %p184 = pneg %p76
      %p185 = pneg %p105
      %p186 = pneg %p102
      %s187 = smul.u32 16, %s16
      %p188 = scmp.lt.s32.totalorder %s187, 31
      %s189 = scalar_select %p188, %s187, 31
      %s190 = smul.addr %s189, 8
      %s191 = scalar_lea.vmem %s3, %s190
      %p192 = pneg %p131
      %p193 = pneg %p128
      %s194 = smul.u32 8, %s16
      %p195 = scmp.lt.s32.totalorder %s194, 15
      %s196 = scalar_select %p195, %s194, 15
      %s197 = smul.addr %s196, 8
      %s198 = scalar_lea.vmem %s4, %s197
      %s199 = smul.u32 16, %s16
      %p200 = scmp.lt.s32.totalorder %s199, 31
      %s201 = scalar_select %p200, %s199, 31
      %s202 = smul.addr %s201, 9
      %s203 = smul.addr %s202, 4
      %s204 = scalar_lea.vmem %s0, %s203
      %s205 = smul.u32 16, %s16
      %s206 = smul.u32 16, %s16
      %p207 = scmp.lt.s32.totalorder %s206, 31
      %s208 = scalar_select %p207, %s206, 31
      %s209 = smul.addr %s208, 8
      %s210 = scalar_lea.vmem %s3, %s209
      %s211 = smul.u32 16, %s16
      %s212 = smul.u32 8, %s16
      %p213 = scmp.lt.s32.totalorder %s212, 15
      %s214 = scalar_select %p213, %s212, 15
      %s215 = smul.addr %s214, 8
      %s216 = scalar_lea.vmem %s4, %s215
      %s217 = smul.u32 8, %s16
      %v218 = vld [vmem:[%s204] sm:$0xff]
      %v219 = vld [vmem:[%s204 + $0x8] sm:$0xff]
      %v220 = vld [vmem:[%s204 + $0x10] sm:$0xff]
      %v221 = vld [vmem:[%s204 + $0x18] sm:$0xff]
      %v222 = vld [vmem:[%s204 + $0x20] sm:$0xf]
      %v223 = vld [vmem:[%s204 + $0x24] sm:$0xff]
      %v224 = vld [vmem:[%s204 + $0x2c] sm:$0xff]
      %v225 = vld [vmem:[%s204 + $0x34] sm:$0xff]
      %v226 = vld [vmem:[%s204 + $0x3c] sm:$0xff]
      %v227 = vld [vmem:[%s204 + $0x44] sm:$0xf]
      %v228 = vld [vmem:[%s204 + $0x48] sm:$0xff]
      %v229 = vld [vmem:[%s204 + $0x50] sm:$0xff]
      %v230 = vld [vmem:[%s204 + $0x58] sm:$0xff]
      %v231 = vld [vmem:[%s204 + $0x60] sm:$0xff]
      %v232 = vld [vmem:[%s204 + $0x68] sm:$0xf]
      %v233 = vld [vmem:[%s204 + $0x6c] sm:$0xff]
      %v234 = vld [vmem:[%s204 + $0x74] sm:$0xff]
      %v235 = vld [vmem:[%s204 + $0x7c] sm:$0xff]
      %v236 = vld [vmem:[%s204 + $0x84] sm:$0xff]
      %v237 = vld [vmem:[%s204 + $0x8c] sm:$0xf]
      %v238 = vld [vmem:[%s204 + $0x90] sm:$0xff]
      %v239 = vld [vmem:[%s204 + $0x98] sm:$0xff]
      %v240 = vld [vmem:[%s204 + $0xa0] sm:$0xff]
      %v241 = vld [vmem:[%s204 + $0xa8] sm:$0xff]
      %v242 = vld [vmem:[%s204 + $0xb0] sm:$0xf]
      %v243 = vld [vmem:[%s204 + $0xb4] sm:$0xff]
      %v244 = vld [vmem:[%s204 + $0xbc] sm:$0xff]
      %v245 = vld [vmem:[%s204 + $0xc4] sm:$0xff]
      %v246 = vld [vmem:[%s204 + $0xcc] sm:$0xff]
      %v247 = vld [vmem:[%s204 + $0xd4] sm:$0xf]
      %v248 = vld [vmem:[%s204 + $0xd8] sm:$0xff]
      %v249 = vld [vmem:[%s204 + $0xe0] sm:$0xff]
      %v250 = vld [vmem:[%s204 + $0xe8] sm:$0xff]
      %v251 = vld [vmem:[%s204 + $0xf0] sm:$0xff]
      %v252 = vld [vmem:[%s204 + $0xf8] sm:$0xf]
      %v253 = vld [vmem:[%s204 + $0xfc] sm:$0xff]
      %v254 = vld [vmem:[%s204 + $0x104] sm:$0xff]
      %v255 = vld [vmem:[%s204 + $0x10c] sm:$0xff]
      %v256 = vld [vmem:[%s204 + $0x114] sm:$0xff]
      %v257 = vld [vmem:[%s204 + $0x11c] sm:$0xf]
      %v258 = vld [vmem:[%s204 + $0x120] sm:$0xff]
      %v259 = vld [vmem:[%s204 + $0x128] sm:$0xff]
      %v260 = vld [vmem:[%s204 + $0x130] sm:$0xff]
      %v261 = vld [vmem:[%s204 + $0x138] sm:$0xff]
      %v262 = vld [vmem:[%s204 + $0x140] sm:$0xf]
      %v263 = vld [vmem:[%s204 + $0x144] sm:$0xff]
      %v264 = vld [vmem:[%s204 + $0x14c] sm:$0xff]
      %v265 = vld [vmem:[%s204 + $0x154] sm:$0xff]
      %v266 = vld [vmem:[%s204 + $0x15c] sm:$0xff]
      %v267 = vld [vmem:[%s204 + $0x164] sm:$0xf]
      %v268 = vld [vmem:[%s204 + $0x168] sm:$0xff]
      %v269 = vld [vmem:[%s204 + $0x170] sm:$0xff]
      %v270 = vld [vmem:[%s204 + $0x178] sm:$0xff]
      %v271 = vld [vmem:[%s204 + $0x180] sm:$0xff]
      %v272 = vld [vmem:[%s204 + $0x188] sm:$0xf]
      %v273 = vld [vmem:[%s204 + $0x18c] sm:$0xff]
      %v274 = vld [vmem:[%s204 + $0x194] sm:$0xff]
      %v275 = vld [vmem:[%s204 + $0x19c] sm:$0xff]
      %v276 = vld [vmem:[%s204 + $0x1a4] sm:$0xff]
      %v277 = vld [vmem:[%s204 + $0x1ac] sm:$0xf]
      %v278 = vld [vmem:[%s204 + $0x1b0] sm:$0xff]
      %v279 = vld [vmem:[%s204 + $0x1b8] sm:$0xff]
      %v280 = vld [vmem:[%s204 + $0x1c0] sm:$0xff]
      %v281 = vld [vmem:[%s204 + $0x1c8] sm:$0xff]
      %v282 = vld [vmem:[%s204 + $0x1d0] sm:$0xf]
      %v283 = vld [vmem:[%s204 + $0x1d4] sm:$0xff]
      %v284 = vld [vmem:[%s204 + $0x1dc] sm:$0xff]
      %v285 = vld [vmem:[%s204 + $0x1e4] sm:$0xff]
      %v286 = vld [vmem:[%s204 + $0x1ec] sm:$0xff]
      %v287 = vld [vmem:[%s204 + $0x1f4] sm:$0xf]
      %v288 = vld [vmem:[%s204 + $0x1f8] sm:$0xff]
      %v289 = vld [vmem:[%s204 + $0x200] sm:$0xff]
      %v290 = vld [vmem:[%s204 + $0x208] sm:$0xff]
      %v291 = vld [vmem:[%s204 + $0x210] sm:$0xff]
      %v292 = vld [vmem:[%s204 + $0x218] sm:$0xf]
      %v293 = vld [vmem:[%s204 + $0x21c] sm:$0xff]
      %v294 = vld [vmem:[%s204 + $0x224] sm:$0xff]
      %v295 = vld [vmem:[%s204 + $0x22c] sm:$0xff]
      %v296 = vld [vmem:[%s204 + $0x234] sm:$0xff]
      %v297 = vld [vmem:[%s204 + $0x23c] sm:$0xf]
      %v298 = vld [vmem:[%s1] sm:$0xf]
      %v299 = vld [vmem:[%s1 + $0x4] sm:$0xf]
      %v300 = vld [vmem:[%s1 + $0x8] sm:$0xf]
      %v301 = vld [vmem:[%s1 + $0xc] sm:$0xf]
      %v302 = vld [vmem:[%s1 + $0x10] sm:$0xf]
      %v303 = vld [vmem:[%s1 + $0x14] sm:$0xf]
      %v304 = vld [vmem:[%s1 + $0x18] sm:$0xf]
      %v305 = vld [vmem:[%s1 + $0x1c] sm:$0xf]
      %v306 = vld [vmem:[%s1 + $0x20] sm:$0xf]
      %v307 = vld [vmem:[%s1 + $0x24] sm:$0xf]
      %v308 = vld [vmem:[%s1 + $0x28] sm:$0xf]
      %v309 = vld [vmem:[%s1 + $0x2c] sm:$0xf]
      %v310 = vld [vmem:[%s1 + $0x30] sm:$0xf]
      %v311 = vld [vmem:[%s1 + $0x34] sm:$0xf]
      %v312 = vld [vmem:[%s1 + $0x38] sm:$0xf]
      %v313 = vld [vmem:[%s1 + $0x3c] sm:$0xf]
      %v314 = vld [vmem:[%s1 + $0x40] sm:$0xf]
      %v315 = vld [vmem:[%s1 + $0x44] sm:$0xf]
      %v316 = vld [vmem:[%s1 + $0x48] sm:$0xf]
      %v317 = vld [vmem:[%s1 + $0x4c] sm:$0xf]
      %v318 = vld [vmem:[%s1 + $0x50] sm:$0xf]
      %v319 = vld [vmem:[%s1 + $0x54] sm:$0xf]
      %v320 = vld [vmem:[%s1 + $0x58] sm:$0xf]
      %v321 = vld [vmem:[%s1 + $0x5c] sm:$0xf]
      %v322 = vld [vmem:[%s1 + $0x60] sm:$0xf]
      %v323 = vld [vmem:[%s1 + $0x64] sm:$0xf]
      %v324 = vld [vmem:[%s1 + $0x68] sm:$0xf]
      %v325 = vld [vmem:[%s1 + $0x6c] sm:$0xf]
      %v326 = vld [vmem:[%s1 + $0x70] sm:$0xf]
      %v327 = vld [vmem:[%s1 + $0x74] sm:$0xf]
      %v328 = vld [vmem:[%s1 + $0x78] sm:$0xf]
      %v329 = vld [vmem:[%s1 + $0x7c] sm:$0xf]
      %v330 = vld [vmem:[%s1 + $0x80] sm:$0xf]
      %v331 = vld [vmem:[%s1 + $0x84] sm:$0xf]
      %v332 = vld [vmem:[%s1 + $0x88] sm:$0xf]
      %v333 = vld [vmem:[%s1 + $0x8c] sm:$0xf]
      %v334 = vld [vmem:[%s1 + $0x90] sm:$0xf]
      %v335 = vld [vmem:[%s1 + $0x94] sm:$0xf]
      %v336 = vld [vmem:[%s1 + $0x98] sm:$0xf]
      %v337 = vld [vmem:[%s1 + $0x9c] sm:$0xf]
      %v338 = vld [vmem:[%s1 + $0xa0] sm:$0xf]
      %v339 = vld [vmem:[%s1 + $0xa4] sm:$0xf]
      %v340 = vld [vmem:[%s1 + $0xa8] sm:$0xf]
      %v341 = vld [vmem:[%s1 + $0xac] sm:$0xf]
      %v342 = vld [vmem:[%s1 + $0xb0] sm:$0xf]
      %v343 = vld [vmem:[%s1 + $0xb4] sm:$0xf]
      %v344 = vld [vmem:[%s1 + $0xb8] sm:$0xf]
      %v345 = vld [vmem:[%s1 + $0xbc] sm:$0xf]
      %v346 = vld [vmem:[%s1 + $0xc0] sm:$0xf]
      %v347 = vld [vmem:[%s1 + $0xc4] sm:$0xf]
      %v348 = vld [vmem:[%s1 + $0xc8] sm:$0xf]
      %v349 = vld [vmem:[%s1 + $0xcc] sm:$0xf]
      %v350 = vld [vmem:[%s1 + $0xd0] sm:$0xf]
      %v351 = vld [vmem:[%s1 + $0xd4] sm:$0xf]
      %v352 = vld [vmem:[%s1 + $0xd8] sm:$0xf]
      %v353 = vld [vmem:[%s1 + $0xdc] sm:$0xf]
      %v354 = vld [vmem:[%s1 + $0xe0] sm:$0xf]
      %v355 = vld [vmem:[%s1 + $0xe4] sm:$0xf]
      %v356 = vld [vmem:[%s1 + $0xe8] sm:$0xf]
      %v357 = vld [vmem:[%s1 + $0xec] sm:$0xf]
      %v358 = vld [vmem:[%s1 + $0xf0] sm:$0xf]
      %v359 = vld [vmem:[%s1 + $0xf4] sm:$0xf]
      %v360 = vld [vmem:[%s1 + $0xf8] sm:$0xf]
      %v361 = vld [vmem:[%s1 + $0xfc] sm:$0xf]
      %v362 = vld [vmem:[%s1 + $0x100] sm:$0xf]
      %v363 = vld [vmem:[%s1 + $0x104] sm:$0xf]
      %v364 = vld [vmem:[%s1 + $0x108] sm:$0xf]
      %v365 = vld [vmem:[%s1 + $0x10c] sm:$0xf]
      %v366 = vld [vmem:[%s1 + $0x110] sm:$0xf]
      %v367 = vld [vmem:[%s1 + $0x114] sm:$0xf]
      %v368 = vld [vmem:[%s1 + $0x118] sm:$0xf]
      %v369 = vld [vmem:[%s1 + $0x11c] sm:$0xf]
      %v370 = vld [vmem:[%s1 + $0x120] sm:$0xf]
      %v371 = vld [vmem:[%s1 + $0x124] sm:$0xf]
      %v372 = vld [vmem:[%s1 + $0x128] sm:$0xf]
      %v373 = vld [vmem:[%s1 + $0x12c] sm:$0xf]
      %v374 = vld [vmem:[%s1 + $0x130] sm:$0xf]
      %v375 = vld [vmem:[%s1 + $0x134] sm:$0xf]
      %v376 = vld [vmem:[%s1 + $0x138] sm:$0xf]
      %v377 = vld [vmem:[%s1 + $0x13c] sm:$0xf]
      %v378 = vld [vmem:[%s1 + $0x140] sm:$0xf]
      %v379 = vld [vmem:[%s1 + $0x144] sm:$0xf]
      %v380 = vld [vmem:[%s1 + $0x148] sm:$0xf]
      %v381 = vld [vmem:[%s1 + $0x14c] sm:$0xf]
      %v382 = vld [vmem:[%s1 + $0x150] sm:$0xf]
      %v383 = vld [vmem:[%s1 + $0x154] sm:$0xf]
      %v384 = vld [vmem:[%s1 + $0x158] sm:$0xf]
      %v385 = vld [vmem:[%s1 + $0x15c] sm:$0xf]
      %v386 = vld [vmem:[%s1 + $0x160] sm:$0xf]
      %v387 = vld [vmem:[%s1 + $0x164] sm:$0xf]
      %v388 = vld [vmem:[%s1 + $0x168] sm:$0xf]
      %v389 = vld [vmem:[%s1 + $0x16c] sm:$0xf]
      %v390 = vld [vmem:[%s1 + $0x170] sm:$0xf]
      %v391 = vld [vmem:[%s1 + $0x174] sm:$0xf]
      %v392 = vld [vmem:[%s1 + $0x178] sm:$0xf]
      %v393 = vld [vmem:[%s1 + $0x17c] sm:$0xf]
      %v394 = vld [vmem:[%s1 + $0x180] sm:$0xf]
      %v395 = vld [vmem:[%s1 + $0x184] sm:$0xf]
      %v396 = vld [vmem:[%s1 + $0x188] sm:$0xf]
      %v397 = vld [vmem:[%s1 + $0x18c] sm:$0xf]
      %v398 = vld [vmem:[%s1 + $0x190] sm:$0xf]
      %v399 = vld [vmem:[%s1 + $0x194] sm:$0xf]
      %v400 = vld [vmem:[%s1 + $0x198] sm:$0xf]
      %v401 = vld [vmem:[%s1 + $0x19c] sm:$0xf]
      %v402 = vld [vmem:[%s1 + $0x1a0] sm:$0xf]
      %v403 = vld [vmem:[%s1 + $0x1a4] sm:$0xf]
      %v404 = vld [vmem:[%s1 + $0x1a8] sm:$0xf]
      %v405 = vld [vmem:[%s1 + $0x1ac] sm:$0xf]
      %v406 = vld [vmem:[%s1 + $0x1b0] sm:$0xf]
      %v407 = vld [vmem:[%s1 + $0x1b4] sm:$0xf]
      %v408 = vld [vmem:[%s1 + $0x1b8] sm:$0xf]
      %v409 = vld [vmem:[%s1 + $0x1bc] sm:$0xf]
      %v410 = vld [vmem:[%s1 + $0x1c0] sm:$0xf]
      %v411 = vld [vmem:[%s1 + $0x1c4] sm:$0xf]
      %v412 = vld [vmem:[%s1 + $0x1c8] sm:$0xf]
      %v413 = vld [vmem:[%s1 + $0x1cc] sm:$0xf]
      %v414 = vld [vmem:[%s1 + $0x1d0] sm:$0xf]
      %v415 = vld [vmem:[%s1 + $0x1d4] sm:$0xf]
      %v416 = vld [vmem:[%s1 + $0x1d8] sm:$0xf]
      %v417 = vld [vmem:[%s1 + $0x1dc] sm:$0xf]
      %v418 = vld [vmem:[%s1 + $0x1e0] sm:$0xf]
      %v419 = vld [vmem:[%s1 + $0x1e4] sm:$0xf]
      %v420 = vld [vmem:[%s1 + $0x1e8] sm:$0xf]
      %v421 = vld [vmem:[%s1 + $0x1ec] sm:$0xf]
      %v422 = vld [vmem:[%s1 + $0x1f0] sm:$0xf]
      %v423 = vld [vmem:[%s1 + $0x1f4] sm:$0xf]
      %v424 = vld [vmem:[%s1 + $0x1f8] sm:$0xf]
      %v425 = vld [vmem:[%s1 + $0x1fc] sm:$0xf]
      %v426 = vld [vmem:[%s1 + $0x200] sm:$0xf]
      %v427 = vld [vmem:[%s1 + $0x204] sm:$0xf]
      %v428 = vld [vmem:[%s1 + $0x208] sm:$0xf]
      %v429 = vld [vmem:[%s1 + $0x20c] sm:$0xf]
      %v430 = vld [vmem:[%s1 + $0x210] sm:$0xf]
      %v431 = vld [vmem:[%s1 + $0x214] sm:$0xf]
      %v432 = vld [vmem:[%s1 + $0x218] sm:$0xf]
      %v433 = vld [vmem:[%s1 + $0x21c] sm:$0xf]
      %v434 = vld [vmem:[%s1 + $0x220] sm:$0xf]
      %v435 = vld [vmem:[%s1 + $0x224] sm:$0xf]
      %v436 = vld [vmem:[%s1 + $0x228] sm:$0xf]
      %v437 = vld [vmem:[%s1 + $0x22c] sm:$0xf]
      %v438 = vld [vmem:[%s1 + $0x230] sm:$0xf]
      %v439 = vld [vmem:[%s1 + $0x234] sm:$0xf]
      %v440 = vld [vmem:[%s1 + $0x238] sm:$0xf]
      %v441 = vld [vmem:[%s1 + $0x23c] sm:$0xf]
      %v442 = vld [vmem:[%s2] sm:$0x1]
      %v444 = vperm.slane %v442, 0
      %v526 = vunpack.c.l.b16 %v218
      %v527 = vunpack.c.h.b16 %v218
      %v528 = vunpack.c.l.b16 %v219
      %v529 = vunpack.c.h.b16 %v219
      %v530 = vunpack.c.l.b16 %v220
      %v531 = vunpack.c.h.b16 %v220
      %v532 = vunpack.c.l.b16 %v221
      %v533 = vunpack.c.h.b16 %v221
      %v534 = vunpack.c.l.b16 %v222
      %v535 = vunpack.c.l.b16 %v223
      %v536 = vunpack.c.h.b16 %v223
      %v537 = vunpack.c.l.b16 %v224
      %v538 = vunpack.c.h.b16 %v224
      %v539 = vunpack.c.l.b16 %v225
      %v540 = vunpack.c.h.b16 %v225
      %v541 = vunpack.c.l.b16 %v226
      %v542 = vunpack.c.h.b16 %v226
      %v543 = vunpack.c.l.b16 %v227
      %v544 = vunpack.c.l.b16 %v228
      %v545 = vunpack.c.h.b16 %v228
      %v546 = vunpack.c.l.b16 %v229
      %v547 = vunpack.c.h.b16 %v229
      %v548 = vunpack.c.l.b16 %v230
      %v549 = vunpack.c.h.b16 %v230
      %v550 = vunpack.c.l.b16 %v231
      %v551 = vunpack.c.h.b16 %v231
      %v552 = vunpack.c.l.b16 %v232
      %v553 = vunpack.c.l.b16 %v233
      %v554 = vunpack.c.h.b16 %v233
      %v555 = vunpack.c.l.b16 %v234
      %v556 = vunpack.c.h.b16 %v234
      %v557 = vunpack.c.l.b16 %v235
      %v558 = vunpack.c.h.b16 %v235
      %v559 = vunpack.c.l.b16 %v236
      %v560 = vunpack.c.h.b16 %v236
      %v561 = vunpack.c.l.b16 %v237
      %v562 = vunpack.c.l.b16 %v238
      %v563 = vunpack.c.h.b16 %v238
      %v564 = vunpack.c.l.b16 %v239
      %v565 = vunpack.c.h.b16 %v239
      %v566 = vunpack.c.l.b16 %v240
      %v567 = vunpack.c.h.b16 %v240
      %v568 = vunpack.c.l.b16 %v241
      %v569 = vunpack.c.h.b16 %v241
      %v570 = vunpack.c.l.b16 %v242
      %v571 = vunpack.c.l.b16 %v243
      %v572 = vunpack.c.h.b16 %v243
      %v573 = vunpack.c.l.b16 %v244
      %v574 = vunpack.c.h.b16 %v244
      %v575 = vunpack.c.l.b16 %v245
      %v576 = vunpack.c.h.b16 %v245
      %v577 = vunpack.c.l.b16 %v246
      %v578 = vunpack.c.h.b16 %v246
      %v579 = vunpack.c.l.b16 %v247
      %v580 = vunpack.c.l.b16 %v248
      %v581 = vunpack.c.h.b16 %v248
      %v582 = vunpack.c.l.b16 %v249
      %v583 = vunpack.c.h.b16 %v249
      %v584 = vunpack.c.l.b16 %v250
      %v585 = vunpack.c.h.b16 %v250
      %v586 = vunpack.c.l.b16 %v251
      %v587 = vunpack.c.h.b16 %v251
      %v588 = vunpack.c.l.b16 %v252
      %v589 = vunpack.c.l.b16 %v253
      %v590 = vunpack.c.h.b16 %v253
      %v591 = vunpack.c.l.b16 %v254
      %v592 = vunpack.c.h.b16 %v254
      %v593 = vunpack.c.l.b16 %v255
      %v594 = vunpack.c.h.b16 %v255
      %v595 = vunpack.c.l.b16 %v256
      %v596 = vunpack.c.h.b16 %v256
      %v597 = vunpack.c.l.b16 %v257
      %v598 = vunpack.c.l.b16 %v258
      %v599 = vunpack.c.h.b16 %v258
      %v600 = vunpack.c.l.b16 %v259
      %v601 = vunpack.c.h.b16 %v259
      %v602 = vunpack.c.l.b16 %v260
      %v603 = vunpack.c.h.b16 %v260
      %v604 = vunpack.c.l.b16 %v261
      %v605 = vunpack.c.h.b16 %v261
      %v606 = vunpack.c.l.b16 %v262
      %v607 = vunpack.c.l.b16 %v263
      %v608 = vunpack.c.h.b16 %v263
      %v609 = vunpack.c.l.b16 %v264
      %v610 = vunpack.c.h.b16 %v264
      %v611 = vunpack.c.l.b16 %v265
      %v612 = vunpack.c.h.b16 %v265
      %v613 = vunpack.c.l.b16 %v266
      %v614 = vunpack.c.h.b16 %v266
      %v615 = vunpack.c.l.b16 %v267
      %v616 = vunpack.c.l.b16 %v268
      %v617 = vunpack.c.h.b16 %v268
      %v618 = vunpack.c.l.b16 %v269
      %v619 = vunpack.c.h.b16 %v269
      %v620 = vunpack.c.l.b16 %v270
      %v621 = vunpack.c.h.b16 %v270
      %v622 = vunpack.c.l.b16 %v271
      %v623 = vunpack.c.h.b16 %v271
      %v624 = vunpack.c.l.b16 %v272
      %v625 = vunpack.c.l.b16 %v273
      %v626 = vunpack.c.h.b16 %v273
      %v627 = vunpack.c.l.b16 %v274
      %v628 = vunpack.c.h.b16 %v274
      %v629 = vunpack.c.l.b16 %v275
      %v630 = vunpack.c.h.b16 %v275
      %v631 = vunpack.c.l.b16 %v276
      %v632 = vunpack.c.h.b16 %v276
      %v633 = vunpack.c.l.b16 %v277
      %v634 = vunpack.c.l.b16 %v278
      %v635 = vunpack.c.h.b16 %v278
      %v636 = vunpack.c.l.b16 %v279
      %v637 = vunpack.c.h.b16 %v279
      %v638 = vunpack.c.l.b16 %v280
      %v639 = vunpack.c.h.b16 %v280
      %v640 = vunpack.c.l.b16 %v281
      %v641 = vunpack.c.h.b16 %v281
      %v642 = vunpack.c.l.b16 %v282
      %v643 = vunpack.c.l.b16 %v283
      %v644 = vunpack.c.h.b16 %v283
      %v645 = vunpack.c.l.b16 %v284
      %v646 = vunpack.c.h.b16 %v284
      %v647 = vunpack.c.l.b16 %v285
      %v648 = vunpack.c.h.b16 %v285
      %v649 = vunpack.c.l.b16 %v286
      %v650 = vunpack.c.h.b16 %v286
      %v651 = vunpack.c.l.b16 %v287
      %v652 = vunpack.c.l.b16 %v288
      %v653 = vunpack.c.h.b16 %v288
      %v654 = vunpack.c.l.b16 %v289
      %v655 = vunpack.c.h.b16 %v289
      %v656 = vunpack.c.l.b16 %v290
      %v657 = vunpack.c.h.b16 %v290
      %v658 = vunpack.c.l.b16 %v291
      %v659 = vunpack.c.h.b16 %v291
      %v660 = vunpack.c.l.b16 %v292
      %v661 = vunpack.c.l.b16 %v293
      %v662 = vunpack.c.h.b16 %v293
      %v663 = vunpack.c.l.b16 %v294
      %v664 = vunpack.c.h.b16 %v294
      %v665 = vunpack.c.l.b16 %v295
      %v666 = vunpack.c.h.b16 %v295
      %v667 = vunpack.c.l.b16 %v296
      %v668 = vunpack.c.h.b16 %v296
      %v669 = vunpack.c.l.b16 %v297
      %v670 = vpack.c.b16 %v535, %v526
      %v671 = vpack.c.b16 %v536, %v527
      %v672 = vpack.c.b16 %v537, %v528
      %v673 = vpack.c.b16 %v538, %v529
      %v674 = vpack.c.b16 %v539, %v530
      %v675 = vpack.c.b16 %v540, %v531
      %v676 = vpack.c.b16 %v541, %v532
      %v677 = vpack.c.b16 %v542, %v533
      %v678 = vpack.c.b16 %v543, %v534
      %v679 = vpack.c.b16 %v553, %v544
      %v680 = vpack.c.b16 %v554, %v545
      %v681 = vpack.c.b16 %v555, %v546
      %v682 = vpack.c.b16 %v556, %v547
      %v683 = vpack.c.b16 %v557, %v548
      %v684 = vpack.c.b16 %v558, %v549
      %v685 = vpack.c.b16 %v559, %v550
      %v686 = vpack.c.b16 %v560, %v551
      %v687 = vpack.c.b16 %v561, %v552
      %v688 = vpack.c.b16 %v571, %v562
      %v689 = vpack.c.b16 %v572, %v563
      %v690 = vpack.c.b16 %v573, %v564
      %v691 = vpack.c.b16 %v574, %v565
      %v692 = vpack.c.b16 %v575, %v566
      %v693 = vpack.c.b16 %v576, %v567
      %v694 = vpack.c.b16 %v577, %v568
      %v695 = vpack.c.b16 %v578, %v569
      %v696 = vpack.c.b16 %v579, %v570
      %v697 = vpack.c.b16 %v589, %v580
      %v698 = vpack.c.b16 %v590, %v581
      %v699 = vpack.c.b16 %v591, %v582
      %v700 = vpack.c.b16 %v592, %v583
      %v701 = vpack.c.b16 %v593, %v584
      %v702 = vpack.c.b16 %v594, %v585
      %v703 = vpack.c.b16 %v595, %v586
      %v704 = vpack.c.b16 %v596, %v587
      %v705 = vpack.c.b16 %v597, %v588
      %v706 = vpack.c.b16 %v607, %v598
      %v707 = vpack.c.b16 %v608, %v599
      %v708 = vpack.c.b16 %v609, %v600
      %v709 = vpack.c.b16 %v610, %v601
      %v710 = vpack.c.b16 %v611, %v602
      %v711 = vpack.c.b16 %v612, %v603
      %v712 = vpack.c.b16 %v613, %v604
      %v713 = vpack.c.b16 %v614, %v605
      %v714 = vpack.c.b16 %v615, %v606
      %v715 = vpack.c.b16 %v625, %v616
      %v716 = vpack.c.b16 %v626, %v617
      %v717 = vpack.c.b16 %v627, %v618
      %v718 = vpack.c.b16 %v628, %v619
      %v719 = vpack.c.b16 %v629, %v620
      %v720 = vpack.c.b16 %v630, %v621
      %v721 = vpack.c.b16 %v631, %v622
      %v722 = vpack.c.b16 %v632, %v623
      %v723 = vpack.c.b16 %v633, %v624
      %v724 = vpack.c.b16 %v643, %v634
      %v725 = vpack.c.b16 %v644, %v635
      %v726 = vpack.c.b16 %v645, %v636
      %v727 = vpack.c.b16 %v646, %v637
      %v728 = vpack.c.b16 %v647, %v638
      %v729 = vpack.c.b16 %v648, %v639
      %v730 = vpack.c.b16 %v649, %v640
      %v731 = vpack.c.b16 %v650, %v641
      %v732 = vpack.c.b16 %v651, %v642
      %v733 = vpack.c.b16 %v661, %v652
      %v734 = vpack.c.b16 %v662, %v653
      %v735 = vpack.c.b16 %v663, %v654
      %v736 = vpack.c.b16 %v664, %v655
      %v737 = vpack.c.b16 %v665, %v656
      %v738 = vpack.c.b16 %v666, %v657
      %v739 = vpack.c.b16 %v667, %v658
      %v740 = vpack.c.b16 %v668, %v659
      %v741 = vpack.c.b16 %v669, %v660
      %v958 = vunpack.c.l.b16 %v298
      %v959 = vunpack.c.l.b16 %v299
      %v960 = vunpack.c.l.b16 %v300
      %v961 = vunpack.c.l.b16 %v301
      %v962 = vunpack.c.l.b16 %v302
      %v963 = vunpack.c.l.b16 %v303
      %v964 = vunpack.c.l.b16 %v304
      %v965 = vunpack.c.l.b16 %v305
      %v966 = vunpack.c.l.b16 %v306
      %v967 = vunpack.c.l.b16 %v307
      %v968 = vunpack.c.l.b16 %v308
      %v969 = vunpack.c.l.b16 %v309
      %v970 = vunpack.c.l.b16 %v310
      %v971 = vunpack.c.l.b16 %v311
      %v972 = vunpack.c.l.b16 %v312
      %v973 = vunpack.c.l.b16 %v313
      %v974 = vunpack.c.l.b16 %v314
      %v975 = vunpack.c.l.b16 %v315
      %v976 = vunpack.c.l.b16 %v316
      %v977 = vunpack.c.l.b16 %v317
      %v978 = vunpack.c.l.b16 %v318
      %v979 = vunpack.c.l.b16 %v319
      %v980 = vunpack.c.l.b16 %v320
      %v981 = vunpack.c.l.b16 %v321
      %v982 = vunpack.c.l.b16 %v322
      %v983 = vunpack.c.l.b16 %v323
      %v984 = vunpack.c.l.b16 %v324
      %v985 = vunpack.c.l.b16 %v325
      %v986 = vunpack.c.l.b16 %v326
      %v987 = vunpack.c.l.b16 %v327
      %v988 = vunpack.c.l.b16 %v328
      %v989 = vunpack.c.l.b16 %v329
      %v990 = vunpack.c.l.b16 %v330
      %v991 = vunpack.c.l.b16 %v331
      %v992 = vunpack.c.l.b16 %v332
      %v993 = vunpack.c.l.b16 %v333
      %v994 = vunpack.c.l.b16 %v334
      %v995 = vunpack.c.l.b16 %v335
      %v996 = vunpack.c.l.b16 %v336
      %v997 = vunpack.c.l.b16 %v337
      %v998 = vunpack.c.l.b16 %v338
      %v999 = vunpack.c.l.b16 %v339
      %v1000 = vunpack.c.l.b16 %v340
      %v1001 = vunpack.c.l.b16 %v341
      %v1002 = vunpack.c.l.b16 %v342
      %v1003 = vunpack.c.l.b16 %v343
      %v1004 = vunpack.c.l.b16 %v344
      %v1005 = vunpack.c.l.b16 %v345
      %v1006 = vunpack.c.l.b16 %v346
      %v1007 = vunpack.c.l.b16 %v347
      %v1008 = vunpack.c.l.b16 %v348
      %v1009 = vunpack.c.l.b16 %v349
      %v1010 = vunpack.c.l.b16 %v350
      %v1011 = vunpack.c.l.b16 %v351
      %v1012 = vunpack.c.l.b16 %v352
      %v1013 = vunpack.c.l.b16 %v353
      %v1014 = vunpack.c.l.b16 %v354
      %v1015 = vunpack.c.l.b16 %v355
      %v1016 = vunpack.c.l.b16 %v356
      %v1017 = vunpack.c.l.b16 %v357
      %v1018 = vunpack.c.l.b16 %v358
      %v1019 = vunpack.c.l.b16 %v359
      %v1020 = vunpack.c.l.b16 %v360
      %v1021 = vunpack.c.l.b16 %v361
      %v1022 = vunpack.c.l.b16 %v362
      %v1023 = vunpack.c.l.b16 %v363
      %v1024 = vunpack.c.l.b16 %v364
      %v1025 = vunpack.c.l.b16 %v365
      %v1026 = vunpack.c.l.b16 %v366
      %v1027 = vunpack.c.l.b16 %v367
      %v1028 = vunpack.c.l.b16 %v368
      %v1029 = vunpack.c.l.b16 %v369
      %v1030 = vunpack.c.l.b16 %v370
      %v1031 = vunpack.c.l.b16 %v371
      %v1032 = vunpack.c.l.b16 %v372
      %v1033 = vunpack.c.l.b16 %v373
      %v1034 = vunpack.c.l.b16 %v374
      %v1035 = vunpack.c.l.b16 %v375
      %v1036 = vunpack.c.l.b16 %v376
      %v1037 = vunpack.c.l.b16 %v377
      %v1038 = vunpack.c.l.b16 %v378
      %v1039 = vunpack.c.l.b16 %v379
      %v1040 = vunpack.c.l.b16 %v380
      %v1041 = vunpack.c.l.b16 %v381
      %v1042 = vunpack.c.l.b16 %v382
      %v1043 = vunpack.c.l.b16 %v383
      %v1044 = vunpack.c.l.b16 %v384
      %v1045 = vunpack.c.l.b16 %v385
      %v1046 = vunpack.c.l.b16 %v386
      %v1047 = vunpack.c.l.b16 %v387
      %v1048 = vunpack.c.l.b16 %v388
      %v1049 = vunpack.c.l.b16 %v389
      %v1050 = vunpack.c.l.b16 %v390
      %v1051 = vunpack.c.l.b16 %v391
      %v1052 = vunpack.c.l.b16 %v392
      %v1053 = vunpack.c.l.b16 %v393
      %v1054 = vunpack.c.l.b16 %v394
      %v1055 = vunpack.c.l.b16 %v395
      %v1056 = vunpack.c.l.b16 %v396
      %v1057 = vunpack.c.l.b16 %v397
      %v1058 = vunpack.c.l.b16 %v398
      %v1059 = vunpack.c.l.b16 %v399
      %v1060 = vunpack.c.l.b16 %v400
      %v1061 = vunpack.c.l.b16 %v401
      %v1062 = vunpack.c.l.b16 %v402
      %v1063 = vunpack.c.l.b16 %v403
      %v1064 = vunpack.c.l.b16 %v404
      %v1065 = vunpack.c.l.b16 %v405
      %v1066 = vunpack.c.l.b16 %v406
      %v1067 = vunpack.c.l.b16 %v407
      %v1068 = vunpack.c.l.b16 %v408
      %v1069 = vunpack.c.l.b16 %v409
      %v1070 = vunpack.c.l.b16 %v410
      %v1071 = vunpack.c.l.b16 %v411
      %v1072 = vunpack.c.l.b16 %v412
      %v1073 = vunpack.c.l.b16 %v413
      %v1074 = vunpack.c.l.b16 %v414
      %v1075 = vunpack.c.l.b16 %v415
      %v1076 = vunpack.c.l.b16 %v416
      %v1077 = vunpack.c.l.b16 %v417
      %v1078 = vunpack.c.l.b16 %v418
      %v1079 = vunpack.c.l.b16 %v419
      %v1080 = vunpack.c.l.b16 %v420
      %v1081 = vunpack.c.l.b16 %v421
      %v1082 = vunpack.c.l.b16 %v422
      %v1083 = vunpack.c.l.b16 %v423
      %v1084 = vunpack.c.l.b16 %v424
      %v1085 = vunpack.c.l.b16 %v425
      %v1086 = vunpack.c.l.b16 %v426
      %v1087 = vunpack.c.l.b16 %v427
      %v1088 = vunpack.c.l.b16 %v428
      %v1089 = vunpack.c.l.b16 %v429
      %v1090 = vunpack.c.l.b16 %v430
      %v1091 = vunpack.c.l.b16 %v431
      %v1092 = vunpack.c.l.b16 %v432
      %v1093 = vunpack.c.l.b16 %v433
      %v1094 = vunpack.c.l.b16 %v434
      %v1095 = vunpack.c.l.b16 %v435
      %v1096 = vunpack.c.l.b16 %v436
      %v1097 = vunpack.c.l.b16 %v437
      %v1098 = vunpack.c.l.b16 %v438
      %v1099 = vunpack.c.l.b16 %v439
      %v1100 = vunpack.c.l.b16 %v440
      %v1101 = vunpack.c.l.b16 %v441
      %v1102 = vpack.c.b16 %v959, %v958
      %v1103 = vpack.c.b16 %v961, %v960
      %v1104 = vpack.c.b16 %v963, %v962
      %v1105 = vpack.c.b16 %v965, %v964
      %v1106 = vpack.c.b16 %v967, %v966
      %v1107 = vpack.c.b16 %v969, %v968
      %v1108 = vpack.c.b16 %v971, %v970
      %v1109 = vpack.c.b16 %v973, %v972
      %v1110 = vpack.c.b16 %v975, %v974
      %v1111 = vpack.c.b16 %v977, %v976
      %v1112 = vpack.c.b16 %v979, %v978
      %v1113 = vpack.c.b16 %v981, %v980
      %v1114 = vpack.c.b16 %v983, %v982
      %v1115 = vpack.c.b16 %v985, %v984
      %v1116 = vpack.c.b16 %v987, %v986
      %v1117 = vpack.c.b16 %v989, %v988
      %v1118 = vpack.c.b16 %v991, %v990
      %v1119 = vpack.c.b16 %v993, %v992
      %v1120 = vpack.c.b16 %v995, %v994
      %v1121 = vpack.c.b16 %v997, %v996
      %v1122 = vpack.c.b16 %v999, %v998
      %v1123 = vpack.c.b16 %v1001, %v1000
      %v1124 = vpack.c.b16 %v1003, %v1002
      %v1125 = vpack.c.b16 %v1005, %v1004
      %v1126 = vpack.c.b16 %v1007, %v1006
      %v1127 = vpack.c.b16 %v1009, %v1008
      %v1128 = vpack.c.b16 %v1011, %v1010
      %v1129 = vpack.c.b16 %v1013, %v1012
      %v1130 = vpack.c.b16 %v1015, %v1014
      %v1131 = vpack.c.b16 %v1017, %v1016
      %v1132 = vpack.c.b16 %v1019, %v1018
      %v1133 = vpack.c.b16 %v1021, %v1020
      %v1134 = vpack.c.b16 %v1023, %v1022
      %v1135 = vpack.c.b16 %v1025, %v1024
      %v1136 = vpack.c.b16 %v1027, %v1026
      %v1137 = vpack.c.b16 %v1029, %v1028
      %v1138 = vpack.c.b16 %v1031, %v1030
      %v1139 = vpack.c.b16 %v1033, %v1032
      %v1140 = vpack.c.b16 %v1035, %v1034
      %v1141 = vpack.c.b16 %v1037, %v1036
      %v1142 = vpack.c.b16 %v1039, %v1038
      %v1143 = vpack.c.b16 %v1041, %v1040
      %v1144 = vpack.c.b16 %v1043, %v1042
      %v1145 = vpack.c.b16 %v1045, %v1044
      %v1146 = vpack.c.b16 %v1047, %v1046
      %v1147 = vpack.c.b16 %v1049, %v1048
      %v1148 = vpack.c.b16 %v1051, %v1050
      %v1149 = vpack.c.b16 %v1053, %v1052
      %v1150 = vpack.c.b16 %v1055, %v1054
      %v1151 = vpack.c.b16 %v1057, %v1056
      %v1152 = vpack.c.b16 %v1059, %v1058
      %v1153 = vpack.c.b16 %v1061, %v1060
      %v1154 = vpack.c.b16 %v1063, %v1062
      %v1155 = vpack.c.b16 %v1065, %v1064
      %v1156 = vpack.c.b16 %v1067, %v1066
      %v1157 = vpack.c.b16 %v1069, %v1068
      %v1158 = vpack.c.b16 %v1071, %v1070
      %v1159 = vpack.c.b16 %v1073, %v1072
      %v1160 = vpack.c.b16 %v1075, %v1074
      %v1161 = vpack.c.b16 %v1077, %v1076
      %v1162 = vpack.c.b16 %v1079, %v1078
      %v1163 = vpack.c.b16 %v1081, %v1080
      %v1164 = vpack.c.b16 %v1083, %v1082
      %v1165 = vpack.c.b16 %v1085, %v1084
      %v1166 = vpack.c.b16 %v1087, %v1086
      %v1167 = vpack.c.b16 %v1089, %v1088
      %v1168 = vpack.c.b16 %v1091, %v1090
      %v1169 = vpack.c.b16 %v1093, %v1092
      %v1170 = vpack.c.b16 %v1095, %v1094
      %v1171 = vpack.c.b16 %v1097, %v1096
      %v1172 = vpack.c.b16 %v1099, %v1098
      %v1173 = vpack.c.b16 %v1101, %v1100
      %1246 = vmatpush.bf16.msra.mxu0 %v1109
      %1247 = vmatpush.bf16.msra.mxu0 %v1108
      %1248 = vmatpush.bf16.msra.mxu0 %v1107
      %1249 = vmatpush.bf16.msra.mxu0 %v1106
      %1250 = vmatpush.bf16.msra.mxu0 %v1105
      %1251 = vmatpush.bf16.msra.mxu0 %v1104
      %1252 = vmatpush.bf16.msra.mxu0 %v1103
      %1253 = vmatpush.bf16.msra.mxu0 %v1102
      %1254 = vmatmul.bf16.gmra.mxu0 %v670
      %v1255 = vpop.f32.mrf.mxu0
      %v1256 = vadd.f32 %v444, %v1255
      %v1257 = vpop.f32.mrf.mxu0
      %v1258 = vadd.f32 %v444, %v1257
      %1259 = vmatmul.bf16.gmra.mxu0 %v679
      %v1260 = vpop.f32.mrf.mxu0
      %v1261 = vadd.f32 %v444, %v1260
      %v1262 = vpop.f32.mrf.mxu0
      %v1263 = vadd.f32 %v444, %v1262
      %1264 = vmatmul.bf16.gmra.mxu0 %v688
      %v1265 = vpop.f32.mrf.mxu0
      %v1266 = vadd.f32 %v444, %v1265
      %v1267 = vpop.f32.mrf.mxu0
      %v1268 = vadd.f32 %v444, %v1267
      %1269 = vmatmul.bf16.gmra.mxu0 %v697
      %v1270 = vpop.f32.mrf.mxu0
      %v1271 = vadd.f32 %v444, %v1270
      %v1272 = vpop.f32.mrf.mxu0
      %v1273 = vadd.f32 %v444, %v1272
      %1274 = vmatmul.bf16.gmra.mxu0 %v706
      %v1275 = vpop.f32.mrf.mxu0
      %v1276 = vadd.f32 %v444, %v1275
      %v1277 = vpop.f32.mrf.mxu0
      %v1278 = vadd.f32 %v444, %v1277
      %1279 = vmatmul.bf16.gmra.mxu0 %v715
      %v1280 = vpop.f32.mrf.mxu0
      %v1281 = vadd.f32 %v444, %v1280
      %v1282 = vpop.f32.mrf.mxu0
      %v1283 = vadd.f32 %v444, %v1282
      %1284 = vmatmul.bf16.gmra.mxu0 %v724
      %v1285 = vpop.f32.mrf.mxu0
      %v1286 = vadd.f32 %v444, %v1285
      %v1287 = vpop.f32.mrf.mxu0
      %v1288 = vadd.f32 %v444, %v1287
      %1289 = vmatmul.bf16.gmra.mxu0 %v733
      %v1290 = vpop.f32.mrf.mxu0
      %v1291 = vadd.f32 %v444, %v1290
      %v1292 = vpop.f32.mrf.mxu0
      %v1293 = vadd.f32 %v444, %v1292
      %1294 = vdwg.mxu0
      %1295 = vmatpush.bf16.msra.mxu0 %v1117
      %1296 = vmatpush.bf16.msra.mxu0 %v1116
      %1297 = vmatpush.bf16.msra.mxu0 %v1115
      %1298 = vmatpush.bf16.msra.mxu0 %v1114
      %1299 = vmatpush.bf16.msra.mxu0 %v1113
      %1300 = vmatpush.bf16.msra.mxu0 %v1112
      %1301 = vmatpush.bf16.msra.mxu0 %v1111
      %1302 = vmatpush.bf16.msra.mxu0 %v1110
      %1303 = vmatmul.bf16.gmra.mxu0 %v671
      %v1304 = vpop.f32.mrf.mxu0
      %v1305 = vadd.f32 %v1256, %v1304
      %v1306 = vpop.f32.mrf.mxu0
      %v1307 = vadd.f32 %v1258, %v1306
      %1308 = vmatmul.bf16.gmra.mxu0 %v680
      %v1309 = vpop.f32.mrf.mxu0
      %v1310 = vadd.f32 %v1261, %v1309
      %v1311 = vpop.f32.mrf.mxu0
      %v1312 = vadd.f32 %v1263, %v1311
      %1313 = vmatmul.bf16.gmra.mxu0 %v689
      %v1314 = vpop.f32.mrf.mxu0
      %v1315 = vadd.f32 %v1266, %v1314
      %v1316 = vpop.f32.mrf.mxu0
      %v1317 = vadd.f32 %v1268, %v1316
      %1318 = vmatmul.bf16.gmra.mxu0 %v698
      %v1319 = vpop.f32.mrf.mxu0
      %v1320 = vadd.f32 %v1271, %v1319
      %v1321 = vpop.f32.mrf.mxu0
      %v1322 = vadd.f32 %v1273, %v1321
      %1323 = vmatmul.bf16.gmra.mxu0 %v707
      %v1324 = vpop.f32.mrf.mxu0
      %v1325 = vadd.f32 %v1276, %v1324
      %v1326 = vpop.f32.mrf.mxu0
      %v1327 = vadd.f32 %v1278, %v1326
      %1328 = vmatmul.bf16.gmra.mxu0 %v716
      %v1329 = vpop.f32.mrf.mxu0
      %v1330 = vadd.f32 %v1281, %v1329
      %v1331 = vpop.f32.mrf.mxu0
      %v1332 = vadd.f32 %v1283, %v1331
      %1333 = vmatmul.bf16.gmra.mxu0 %v725
      %v1334 = vpop.f32.mrf.mxu0
      %v1335 = vadd.f32 %v1286, %v1334
      %v1336 = vpop.f32.mrf.mxu0
      %v1337 = vadd.f32 %v1288, %v1336
      %1338 = vmatmul.bf16.gmra.mxu0 %v734
      %v1339 = vpop.f32.mrf.mxu0
      %v1340 = vadd.f32 %v1291, %v1339
      %v1341 = vpop.f32.mrf.mxu0
      %v1342 = vadd.f32 %v1293, %v1341
      %1343 = vdwg.mxu0
      %1344 = vmatpush.bf16.msra.mxu0 %v1125
      %1345 = vmatpush.bf16.msra.mxu0 %v1124
      %1346 = vmatpush.bf16.msra.mxu0 %v1123
      %1347 = vmatpush.bf16.msra.mxu0 %v1122
      %1348 = vmatpush.bf16.msra.mxu0 %v1121
      %1349 = vmatpush.bf16.msra.mxu0 %v1120
      %1350 = vmatpush.bf16.msra.mxu0 %v1119
      %1351 = vmatpush.bf16.msra.mxu0 %v1118
      %1352 = vmatmul.bf16.gmra.mxu0 %v672
      %v1353 = vpop.f32.mrf.mxu0
      %v1354 = vadd.f32 %v1305, %v1353
      %v1355 = vpop.f32.mrf.mxu0
      %v1356 = vadd.f32 %v1307, %v1355
      %1357 = vmatmul.bf16.gmra.mxu0 %v681
      %v1358 = vpop.f32.mrf.mxu0
      %v1359 = vadd.f32 %v1310, %v1358
      %v1360 = vpop.f32.mrf.mxu0
      %v1361 = vadd.f32 %v1312, %v1360
      %1362 = vmatmul.bf16.gmra.mxu0 %v690
      %v1363 = vpop.f32.mrf.mxu0
      %v1364 = vadd.f32 %v1315, %v1363
      %v1365 = vpop.f32.mrf.mxu0
      %v1366 = vadd.f32 %v1317, %v1365
      %1367 = vmatmul.bf16.gmra.mxu0 %v699
      %v1368 = vpop.f32.mrf.mxu0
      %v1369 = vadd.f32 %v1320, %v1368
      %v1370 = vpop.f32.mrf.mxu0
      %v1371 = vadd.f32 %v1322, %v1370
      %1372 = vmatmul.bf16.gmra.mxu0 %v708
      %v1373 = vpop.f32.mrf.mxu0
      %v1374 = vadd.f32 %v1325, %v1373
      %v1375 = vpop.f32.mrf.mxu0
      %v1376 = vadd.f32 %v1327, %v1375
      %1377 = vmatmul.bf16.gmra.mxu0 %v717
      %v1378 = vpop.f32.mrf.mxu0
      %v1379 = vadd.f32 %v1330, %v1378
      %v1380 = vpop.f32.mrf.mxu0
      %v1381 = vadd.f32 %v1332, %v1380
      %1382 = vmatmul.bf16.gmra.mxu0 %v726
      %v1383 = vpop.f32.mrf.mxu0
      %v1384 = vadd.f32 %v1335, %v1383
      %v1385 = vpop.f32.mrf.mxu0
      %v1386 = vadd.f32 %v1337, %v1385
      %1387 = vmatmul.bf16.gmra.mxu0 %v735
      %v1388 = vpop.f32.mrf.mxu0
      %v1389 = vadd.f32 %v1340, %v1388
      %v1390 = vpop.f32.mrf.mxu0
      %v1391 = vadd.f32 %v1342, %v1390
      %1392 = vdwg.mxu0
      %1393 = vmatpush.bf16.msra.mxu0 %v1133
      %1394 = vmatpush.bf16.msra.mxu0 %v1132
      %1395 = vmatpush.bf16.msra.mxu0 %v1131
      %1396 = vmatpush.bf16.msra.mxu0 %v1130
      %1397 = vmatpush.bf16.msra.mxu0 %v1129
      %1398 = vmatpush.bf16.msra.mxu0 %v1128
      %1399 = vmatpush.bf16.msra.mxu0 %v1127
      %1400 = vmatpush.bf16.msra.mxu0 %v1126
      %1401 = vmatmul.bf16.gmra.mxu0 %v673
      %v1402 = vpop.f32.mrf.mxu0
      %v1403 = vadd.f32 %v1354, %v1402
      %v1404 = vpop.f32.mrf.mxu0
      %v1405 = vadd.f32 %v1356, %v1404
      %1406 = vmatmul.bf16.gmra.mxu0 %v682
      %v1407 = vpop.f32.mrf.mxu0
      %v1408 = vadd.f32 %v1359, %v1407
      %v1409 = vpop.f32.mrf.mxu0
      %v1410 = vadd.f32 %v1361, %v1409
      %1411 = vmatmul.bf16.gmra.mxu0 %v691
      %v1412 = vpop.f32.mrf.mxu0
      %v1413 = vadd.f32 %v1364, %v1412
      %v1414 = vpop.f32.mrf.mxu0
      %v1415 = vadd.f32 %v1366, %v1414
      %1416 = vmatmul.bf16.gmra.mxu0 %v700
      %v1417 = vpop.f32.mrf.mxu0
      %v1418 = vadd.f32 %v1369, %v1417
      %v1419 = vpop.f32.mrf.mxu0
      %v1420 = vadd.f32 %v1371, %v1419
      %1421 = vmatmul.bf16.gmra.mxu0 %v709
      %v1422 = vpop.f32.mrf.mxu0
      %v1423 = vadd.f32 %v1374, %v1422
      %v1424 = vpop.f32.mrf.mxu0
      %v1425 = vadd.f32 %v1376, %v1424
      %1426 = vmatmul.bf16.gmra.mxu0 %v718
      %v1427 = vpop.f32.mrf.mxu0
      %v1428 = vadd.f32 %v1379, %v1427
      %v1429 = vpop.f32.mrf.mxu0
      %v1430 = vadd.f32 %v1381, %v1429
      %1431 = vmatmul.bf16.gmra.mxu0 %v727
      %v1432 = vpop.f32.mrf.mxu0
      %v1433 = vadd.f32 %v1384, %v1432
      %v1434 = vpop.f32.mrf.mxu0
      %v1435 = vadd.f32 %v1386, %v1434
      %1436 = vmatmul.bf16.gmra.mxu0 %v736
      %v1437 = vpop.f32.mrf.mxu0
      %v1438 = vadd.f32 %v1389, %v1437
      %v1439 = vpop.f32.mrf.mxu0
      %v1440 = vadd.f32 %v1391, %v1439
      %1441 = vdwg.mxu0
      %1442 = vmatpush.bf16.msra.mxu0 %v1141
      %1443 = vmatpush.bf16.msra.mxu0 %v1140
      %1444 = vmatpush.bf16.msra.mxu0 %v1139
      %1445 = vmatpush.bf16.msra.mxu0 %v1138
      %1446 = vmatpush.bf16.msra.mxu0 %v1137
      %1447 = vmatpush.bf16.msra.mxu0 %v1136
      %1448 = vmatpush.bf16.msra.mxu0 %v1135
      %1449 = vmatpush.bf16.msra.mxu0 %v1134
      %1450 = vmatmul.bf16.gmra.mxu0 %v674
      %v1451 = vpop.f32.mrf.mxu0
      %v1452 = vadd.f32 %v1403, %v1451
      %v1453 = vpop.f32.mrf.mxu0
      %v1454 = vadd.f32 %v1405, %v1453
      %1455 = vmatmul.bf16.gmra.mxu0 %v683
      %v1456 = vpop.f32.mrf.mxu0
      %v1457 = vadd.f32 %v1408, %v1456
      %v1458 = vpop.f32.mrf.mxu0
      %v1459 = vadd.f32 %v1410, %v1458
      %1460 = vmatmul.bf16.gmra.mxu0 %v692
      %v1461 = vpop.f32.mrf.mxu0
      %v1462 = vadd.f32 %v1413, %v1461
      %v1463 = vpop.f32.mrf.mxu0
      %v1464 = vadd.f32 %v1415, %v1463
      %1465 = vmatmul.bf16.gmra.mxu0 %v701
      %v1466 = vpop.f32.mrf.mxu0
      %v1467 = vadd.f32 %v1418, %v1466
      %v1468 = vpop.f32.mrf.mxu0
      %v1469 = vadd.f32 %v1420, %v1468
      %1470 = vmatmul.bf16.gmra.mxu0 %v710
      %v1471 = vpop.f32.mrf.mxu0
      %v1472 = vadd.f32 %v1423, %v1471
      %v1473 = vpop.f32.mrf.mxu0
      %v1474 = vadd.f32 %v1425, %v1473
      %1475 = vmatmul.bf16.gmra.mxu0 %v719
      %v1476 = vpop.f32.mrf.mxu0
      %v1477 = vadd.f32 %v1428, %v1476
      %v1478 = vpop.f32.mrf.mxu0
      %v1479 = vadd.f32 %v1430, %v1478
      %1480 = vmatmul.bf16.gmra.mxu0 %v728
      %v1481 = vpop.f32.mrf.mxu0
      %v1482 = vadd.f32 %v1433, %v1481
      %v1483 = vpop.f32.mrf.mxu0
      %v1484 = vadd.f32 %v1435, %v1483
      %1485 = vmatmul.bf16.gmra.mxu0 %v737
      %v1486 = vpop.f32.mrf.mxu0
      %v1487 = vadd.f32 %v1438, %v1486
      %v1488 = vpop.f32.mrf.mxu0
      %v1489 = vadd.f32 %v1440, %v1488
      %1490 = vdwg.mxu0
      %1491 = vmatpush.bf16.msra.mxu0 %v1149
      %1492 = vmatpush.bf16.msra.mxu0 %v1148
      %1493 = vmatpush.bf16.msra.mxu0 %v1147
      %1494 = vmatpush.bf16.msra.mxu0 %v1146
      %1495 = vmatpush.bf16.msra.mxu0 %v1145
      %1496 = vmatpush.bf16.msra.mxu0 %v1144
      %1497 = vmatpush.bf16.msra.mxu0 %v1143
      %1498 = vmatpush.bf16.msra.mxu0 %v1142
      %1499 = vmatmul.bf16.gmra.mxu0 %v675
      %v1500 = vpop.f32.mrf.mxu0
      %v1501 = vadd.f32 %v1452, %v1500
      %v1502 = vpop.f32.mrf.mxu0
      %v1503 = vadd.f32 %v1454, %v1502
      %1504 = vmatmul.bf16.gmra.mxu0 %v684
      %v1505 = vpop.f32.mrf.mxu0
      %v1506 = vadd.f32 %v1457, %v1505
      %v1507 = vpop.f32.mrf.mxu0
      %v1508 = vadd.f32 %v1459, %v1507
      %1509 = vmatmul.bf16.gmra.mxu0 %v693
      %v1510 = vpop.f32.mrf.mxu0
      %v1511 = vadd.f32 %v1462, %v1510
      %v1512 = vpop.f32.mrf.mxu0
      %v1513 = vadd.f32 %v1464, %v1512
      %1514 = vmatmul.bf16.gmra.mxu0 %v702
      %v1515 = vpop.f32.mrf.mxu0
      %v1516 = vadd.f32 %v1467, %v1515
      %v1517 = vpop.f32.mrf.mxu0
      %v1518 = vadd.f32 %v1469, %v1517
      %1519 = vmatmul.bf16.gmra.mxu0 %v711
      %v1520 = vpop.f32.mrf.mxu0
      %v1521 = vadd.f32 %v1472, %v1520
      %v1522 = vpop.f32.mrf.mxu0
      %v1523 = vadd.f32 %v1474, %v1522
      %1524 = vmatmul.bf16.gmra.mxu0 %v720
      %v1525 = vpop.f32.mrf.mxu0
      %v1526 = vadd.f32 %v1477, %v1525
      %v1527 = vpop.f32.mrf.mxu0
      %v1528 = vadd.f32 %v1479, %v1527
      %1529 = vmatmul.bf16.gmra.mxu0 %v729
      %v1530 = vpop.f32.mrf.mxu0
      %v1531 = vadd.f32 %v1482, %v1530
      %v1532 = vpop.f32.mrf.mxu0
      %v1533 = vadd.f32 %v1484, %v1532
      %1534 = vmatmul.bf16.gmra.mxu0 %v738
      %v1535 = vpop.f32.mrf.mxu0
      %v1536 = vadd.f32 %v1487, %v1535
      %v1537 = vpop.f32.mrf.mxu0
      %v1538 = vadd.f32 %v1489, %v1537
      %1539 = vdwg.mxu0
      %1540 = vmatpush.bf16.msra.mxu0 %v1157
      %1541 = vmatpush.bf16.msra.mxu0 %v1156
      %1542 = vmatpush.bf16.msra.mxu0 %v1155
      %1543 = vmatpush.bf16.msra.mxu0 %v1154
      %1544 = vmatpush.bf16.msra.mxu0 %v1153
      %1545 = vmatpush.bf16.msra.mxu0 %v1152
      %1546 = vmatpush.bf16.msra.mxu0 %v1151
      %1547 = vmatpush.bf16.msra.mxu0 %v1150
      %1548 = vmatmul.bf16.gmra.mxu0 %v676
      %v1549 = vpop.f32.mrf.mxu0
      %v1550 = vadd.f32 %v1501, %v1549
      %v1551 = vpop.f32.mrf.mxu0
      %v1552 = vadd.f32 %v1503, %v1551
      %1553 = vmatmul.bf16.gmra.mxu0 %v685
      %v1554 = vpop.f32.mrf.mxu0
      %v1555 = vadd.f32 %v1506, %v1554
      %v1556 = vpop.f32.mrf.mxu0
      %v1557 = vadd.f32 %v1508, %v1556
      %1558 = vmatmul.bf16.gmra.mxu0 %v694
      %v1559 = vpop.f32.mrf.mxu0
      %v1560 = vadd.f32 %v1511, %v1559
      %v1561 = vpop.f32.mrf.mxu0
      %v1562 = vadd.f32 %v1513, %v1561
      %1563 = vmatmul.bf16.gmra.mxu0 %v703
      %v1564 = vpop.f32.mrf.mxu0
      %v1565 = vadd.f32 %v1516, %v1564
      %v1566 = vpop.f32.mrf.mxu0
      %v1567 = vadd.f32 %v1518, %v1566
      %1568 = vmatmul.bf16.gmra.mxu0 %v712
      %v1569 = vpop.f32.mrf.mxu0
      %v1570 = vadd.f32 %v1521, %v1569
      %v1571 = vpop.f32.mrf.mxu0
      %v1572 = vadd.f32 %v1523, %v1571
      %1573 = vmatmul.bf16.gmra.mxu0 %v721
      %v1574 = vpop.f32.mrf.mxu0
      %v1575 = vadd.f32 %v1526, %v1574
      %v1576 = vpop.f32.mrf.mxu0
      %v1577 = vadd.f32 %v1528, %v1576
      %1578 = vmatmul.bf16.gmra.mxu0 %v730
      %v1579 = vpop.f32.mrf.mxu0
      %v1580 = vadd.f32 %v1531, %v1579
      %v1581 = vpop.f32.mrf.mxu0
      %v1582 = vadd.f32 %v1533, %v1581
      %1583 = vmatmul.bf16.gmra.mxu0 %v739
      %v1584 = vpop.f32.mrf.mxu0
      %v1585 = vadd.f32 %v1536, %v1584
      %v1586 = vpop.f32.mrf.mxu0
      %v1587 = vadd.f32 %v1538, %v1586
      %1588 = vdwg.mxu0
      %1589 = vmatpush.bf16.msra.mxu0 %v1165
      %1590 = vmatpush.bf16.msra.mxu0 %v1164
      %1591 = vmatpush.bf16.msra.mxu0 %v1163
      %1592 = vmatpush.bf16.msra.mxu0 %v1162
      %1593 = vmatpush.bf16.msra.mxu0 %v1161
      %1594 = vmatpush.bf16.msra.mxu0 %v1160
      %1595 = vmatpush.bf16.msra.mxu0 %v1159
      %1596 = vmatpush.bf16.msra.mxu0 %v1158
      %1597 = vmatmul.bf16.gmra.mxu0 %v677
      %v1598 = vpop.f32.mrf.mxu0
      %v1599 = vadd.f32 %v1550, %v1598
      %v1600 = vpop.f32.mrf.mxu0
      %v1601 = vadd.f32 %v1552, %v1600
      %1602 = vmatmul.bf16.gmra.mxu0 %v686
      %v1603 = vpop.f32.mrf.mxu0
      %v1604 = vadd.f32 %v1555, %v1603
      %v1605 = vpop.f32.mrf.mxu0
      %v1606 = vadd.f32 %v1557, %v1605
      %1607 = vmatmul.bf16.gmra.mxu0 %v695
      %v1608 = vpop.f32.mrf.mxu0
      %v1609 = vadd.f32 %v1560, %v1608
      %v1610 = vpop.f32.mrf.mxu0
      %v1611 = vadd.f32 %v1562, %v1610
      %1612 = vmatmul.bf16.gmra.mxu0 %v704
      %v1613 = vpop.f32.mrf.mxu0
      %v1614 = vadd.f32 %v1565, %v1613
      %v1615 = vpop.f32.mrf.mxu0
      %v1616 = vadd.f32 %v1567, %v1615
      %1617 = vmatmul.bf16.gmra.mxu0 %v713
      %v1618 = vpop.f32.mrf.mxu0
      %v1619 = vadd.f32 %v1570, %v1618
      %v1620 = vpop.f32.mrf.mxu0
      %v1621 = vadd.f32 %v1572, %v1620
      %1622 = vmatmul.bf16.gmra.mxu0 %v722
      %v1623 = vpop.f32.mrf.mxu0
      %v1624 = vadd.f32 %v1575, %v1623
      %v1625 = vpop.f32.mrf.mxu0
      %v1626 = vadd.f32 %v1577, %v1625
      %1627 = vmatmul.bf16.gmra.mxu0 %v731
      %v1628 = vpop.f32.mrf.mxu0
      %v1629 = vadd.f32 %v1580, %v1628
      %v1630 = vpop.f32.mrf.mxu0
      %v1631 = vadd.f32 %v1582, %v1630
      %1632 = vmatmul.bf16.gmra.mxu0 %v740
      %v1633 = vpop.f32.mrf.mxu0
      %v1634 = vadd.f32 %v1585, %v1633
      %v1635 = vpop.f32.mrf.mxu0
      %v1636 = vadd.f32 %v1587, %v1635
      %1637 = vdwg.mxu0
      %1638 = vmatpush.bf16.msra.mxu0 %v1173
      %1639 = vmatpush.bf16.msra.mxu0 %v1172
      %1640 = vmatpush.bf16.msra.mxu0 %v1171
      %1641 = vmatpush.bf16.msra.mxu0 %v1170
      %1642 = vmatpush.bf16.msra.mxu0 %v1169
      %1643 = vmatpush.bf16.msra.mxu0 %v1168
      %1644 = vmatpush.bf16.msra.mxu0 %v1167
      %1645 = vmatpush.bf16.msra.mxu0 %v1166
      %1646 = vmatmul.bf16.gmra.mxu0 %v678
      %v1647 = vpop.f32.mrf.mxu0
      %v1648 = vadd.f32 %v1599, %v1647
      %v1649 = vpop.f32.mrf.mxu0
      %v1650 = vadd.f32 %v1601, %v1649
      %1651 = vmatmul.bf16.gmra.mxu0 %v687
      %v1652 = vpop.f32.mrf.mxu0
      %v1653 = vadd.f32 %v1604, %v1652
      %v1654 = vpop.f32.mrf.mxu0
      %v1655 = vadd.f32 %v1606, %v1654
      %1656 = vmatmul.bf16.gmra.mxu0 %v696
      %v1657 = vpop.f32.mrf.mxu0
      %v1658 = vadd.f32 %v1609, %v1657
      %v1659 = vpop.f32.mrf.mxu0
      %v1660 = vadd.f32 %v1611, %v1659
      %1661 = vmatmul.bf16.gmra.mxu0 %v705
      %v1662 = vpop.f32.mrf.mxu0
      %v1663 = vadd.f32 %v1614, %v1662
      %v1664 = vpop.f32.mrf.mxu0
      %v1665 = vadd.f32 %v1616, %v1664
      %1666 = vmatmul.bf16.gmra.mxu0 %v714
      %v1667 = vpop.f32.mrf.mxu0
      %v1668 = vadd.f32 %v1619, %v1667
      %v1669 = vpop.f32.mrf.mxu0
      %v1670 = vadd.f32 %v1621, %v1669
      %1671 = vmatmul.bf16.gmra.mxu0 %v723
      %v1672 = vpop.f32.mrf.mxu0
      %v1673 = vadd.f32 %v1624, %v1672
      %v1674 = vpop.f32.mrf.mxu0
      %v1675 = vadd.f32 %v1626, %v1674
      %1676 = vmatmul.bf16.gmra.mxu0 %v732
      %v1677 = vpop.f32.mrf.mxu0
      %v1678 = vadd.f32 %v1629, %v1677
      %v1679 = vpop.f32.mrf.mxu0
      %v1680 = vadd.f32 %v1631, %v1679
      %1681 = vmatmul.bf16.gmra.mxu0 %v741
      %v1682 = vpop.f32.mrf.mxu0
      %v1683 = vadd.f32 %v1634, %v1682
      %v1684 = vpop.f32.mrf.mxu0
      %v1685 = vadd.f32 %v1636, %v1684
      %1686 = vdwg.mxu0
      %v1687 = vmax.f32 %v1648, 0.0
      %v1688 = vmax.f32 %v1650, 0.0
      %v1689 = vmax.f32 %v1653, 0.0
      %v1690 = vmax.f32 %v1655, 0.0
      %v1691 = vmax.f32 %v1658, 0.0
      %v1692 = vmax.f32 %v1660, 0.0
      %v1693 = vmax.f32 %v1663, 0.0
      %v1694 = vmax.f32 %v1665, 0.0
      %v1695 = vmax.f32 %v1668, 0.0
      %v1696 = vmax.f32 %v1670, 0.0
      %v1697 = vmax.f32 %v1673, 0.0
      %v1698 = vmax.f32 %v1675, 0.0
      %v1699 = vmax.f32 %v1678, 0.0
      %v1700 = vmax.f32 %v1680, 0.0
      %v1701 = vmax.f32 %v1683, 0.0
      %v1702 = vmax.f32 %v1685, 0.0
      %1703 = vst [vmem:[%s210] sm:$0xff] %v1687
      %1704 = vst [vmem:[%s210 + $0x8] sm:$0xff] %v1688
      %1705 = vst [vmem:[%s210 + $0x10] sm:$0xff] %v1689
      %1706 = vst [vmem:[%s210 + $0x18] sm:$0xff] %v1690
      %1707 = vst [vmem:[%s210 + $0x20] sm:$0xff] %v1691
      %1708 = vst [vmem:[%s210 + $0x28] sm:$0xff] %v1692
      %1709 = vst [vmem:[%s210 + $0x30] sm:$0xff] %v1693
      %1710 = vst [vmem:[%s210 + $0x38] sm:$0xff] %v1694
      %1711 = vst [vmem:[%s210 + $0x40] sm:$0xff] %v1695
      %1712 = vst [vmem:[%s210 + $0x48] sm:$0xff] %v1696
      %1713 = vst [vmem:[%s210 + $0x50] sm:$0xff] %v1697
      %1714 = vst [vmem:[%s210 + $0x58] sm:$0xff] %v1698
      %1715 = vst [vmem:[%s210 + $0x60] sm:$0xff] %v1699
      %1716 = vst [vmem:[%s210 + $0x68] sm:$0xff] %v1700
      %1717 = vst [vmem:[%s210 + $0x70] sm:$0xff] %v1701
      %1718 = vst [vmem:[%s210 + $0x78] sm:$0xff] %v1702
      %v1719 = vld [vmem:[%s210] ss:$2 sm:$0xff]
      %s1720 = scalar_lea.vmem %s210, 16
      %v1721 = vld [vmem:[%s1720] ss:$2 sm:$0xff]
      %s1722 = scalar_lea.vmem %s210, 32
      %v1723 = vld [vmem:[%s1722] ss:$2 sm:$0xff]
      %s1724 = scalar_lea.vmem %s210, 48
      %v1725 = vld [vmem:[%s1724] ss:$2 sm:$0xff]
      %s1726 = scalar_lea.vmem %s210, 64
      %v1727 = vld [vmem:[%s1726] ss:$2 sm:$0xff]
      %s1728 = scalar_lea.vmem %s210, 80
      %v1729 = vld [vmem:[%s1728] ss:$2 sm:$0xff]
      %s1730 = scalar_lea.vmem %s210, 96
      %v1731 = vld [vmem:[%s1730] ss:$2 sm:$0xff]
      %s1732 = scalar_lea.vmem %s210, 112
      %v1733 = vld [vmem:[%s1732] ss:$2 sm:$0xff]
      %s1734 = scalar_lea.vmem %s210, 1
      %v1735 = vld [vmem:[%s1734] ss:$2 sm:$0xff]
      %s1736 = scalar_lea.vmem %s210, 17
      %v1737 = vld [vmem:[%s1736] ss:$2 sm:$0xff]
      %s1738 = scalar_lea.vmem %s210, 33
      %v1739 = vld [vmem:[%s1738] ss:$2 sm:$0xff]
      %s1740 = scalar_lea.vmem %s210, 49
      %v1741 = vld [vmem:[%s1740] ss:$2 sm:$0xff]
      %s1742 = scalar_lea.vmem %s210, 65
      %v1743 = vld [vmem:[%s1742] ss:$2 sm:$0xff]
      %s1744 = scalar_lea.vmem %s210, 81
      %v1745 = vld [vmem:[%s1744] ss:$2 sm:$0xff]
      %s1746 = scalar_lea.vmem %s210, 97
      %v1747 = vld [vmem:[%s1746] ss:$2 sm:$0xff]
      %s1748 = scalar_lea.vmem %s210, 113
      %v1749 = vld [vmem:[%s1748] ss:$2 sm:$0xff]
      %v1750 = vmax.f32 %v1719, %v1735
      %v1751 = vmax.f32 %v1721, %v1737
      %v1752 = vmax.f32 %v1723, %v1739
      %v1753 = vmax.f32 %v1725, %v1741
      %v1754 = vmax.f32 %v1727, %v1743
      %v1755 = vmax.f32 %v1729, %v1745
      %v1756 = vmax.f32 %v1731, %v1747
      %v1757 = vmax.f32 %v1733, %v1749
      %1758 = vst [vmem:[%s216] sm:$0xff] %v1750
      %1759 = vst [vmem:[%s216 + $0x8] sm:$0xff] %v1751
      %1760 = vst [vmem:[%s216 + $0x10] sm:$0xff] %v1752
      %1761 = vst [vmem:[%s216 + $0x18] sm:$0xff] %v1753
      %1762 = vst [vmem:[%s216 + $0x20] sm:$0xff] %v1754
      %1763 = vst [vmem:[%s216 + $0x28] sm:$0xff] %v1755
      %1764 = vst [vmem:[%s216 + $0x30] sm:$0xff] %v1756
      %1765 = vst [vmem:[%s216 + $0x38] sm:$0xff] %v1757
      %s1766 = smul.u32 16, %s16
      %p1767 = scmp.lt.s32.totalorder %s1766, 31
      %s1768 = scalar_select %p1767, %s1766, 31
      %s1769 = smul.addr %s1768, 8
      %s1770 = scalar_lea.vmem %s3, %s1769
      %s1771 = smul.u32 8, %s16
      %p1772 = scmp.lt.s32.totalorder %s1771, 15
      %s1773 = scalar_select %p1772, %s1771, 15
      %s1774 = smul.addr %s1773, 8
      %s1775 = scalar_lea.vmem %s4, %s1774
      // Predicated region
      $region33: #{encoder_block_forward.3} parent=31 // pred_check
        %p1776 = pneg %p102
      $region34: #{encoder_block_forward.3} parent=31 // pred_check_branch
        %1778 = sbr.rel (%p1776) target = $region36
      $region35: #{encoder_block_forward.3} parent=31 // pred_region
        %s1779 = smul.u32 16, %s16
      $region36: #{encoder_block_forward.3} parent=31 // pred_fallthru
        _
      // Predicated region
      $region37: #{encoder_block_forward.3} parent=31 // pred_check
        %p1780 = pneg %p128
      $region38: #{encoder_block_forward.3} parent=31 // pred_check_branch
        %1782 = sbr.rel (%p1780) target = $region40
      $region39: #{encoder_block_forward.3} parent=31 // pred_region
        %s1783 = smul.u32 8, %s16
      $region40: #{encoder_block_forward.3} parent=31 // pred_fallthru
        _
    $region32: #{encoder_block_forward.3} parent=5 // pred_fallthru
      _
    %p1784 = scmp.le.s32.totalorder 2, %s11
    // Predicated region
    $region41: #{encoder_block_forward.3} parent=5 // pred_check
      %p1785 = pneg %p1784
    $region42: #{encoder_block_forward.3} parent=5 // pred_check_branch
      %1787 = sbr.rel (%p1785) target = $region44
    $region43: #{encoder_block_forward.3} parent=5 // pred_region
      %s1788 = ssub.s32 %s11, 2
      // Predicated region
      $region45: #{encoder_block_forward.3} parent=43 // pred_check
        %p1789 = pneg %p108
      $region46: #{encoder_block_forward.3} parent=43 // pred_check_branch
        %1791 = sbr.rel (%p1789) target = $region48
      $region47: #{encoder_block_forward.3} parent=43 // pred_region
        %s1792 = smul.u32 16, %s17
        %p1793 = scmp.lt.s32.totalorder %s1792, 31
        %s1794 = scalar_select %p1793, %s1792, 31
        %s1795 = smul.addr %s1794, 8
        %s1796 = scalar_lea.vmem %s3, %s1795
      $region48: #{encoder_block_forward.3} parent=43 // pred_fallthru
        _
      // Predicated region
      $region49: #{encoder_block_forward.3} parent=43 // pred_check
        %p1797 = pneg %p134
      $region50: #{encoder_block_forward.3} parent=43 // pred_check_branch
        %1799 = sbr.rel (%p1797) target = $region52
      $region51: #{encoder_block_forward.3} parent=43 // pred_region
        %s1800 = smul.u32 8, %s17
        %p1801 = scmp.lt.s32.totalorder %s1800, 15
        %s1802 = scalar_select %p1801, %s1800, 15
        %s1803 = smul.addr %s1802, 8
        %s1804 = scalar_lea.vmem %s4, %s1803
      $region52: #{encoder_block_forward.3} parent=43 // pred_fallthru
        _
    $region44: #{encoder_block_forward.3} parent=5 // pred_fallthru
      _
  $region6: #{encoder_block_forward.3} parent=0 // loop_footer
    %s15 = sadd.s32 1, %s11
  $region7: #{encoder_block_forward.3} parent=0 // loop_footer_branch
    %10 = sbr.rel target = $region3
  $region8: #{encoder_block_forward.3} parent=0 // loop_exit
    _

</llo_original>
